<compile_context>
chip_gen: v7x
topology: tpu7x:2x2x1
jax: 0.10.0
libtpu: 0.0.40
codegen_flags: <defaults>
</compile_context>

<pallas_src>
import math
import numpy as np

import jax
import jax.numpy as jnp
from jax.experimental import pallas as pl
from jax.experimental.pallas import tpu as pltpu

# ----------------------- module-consistent small sizes ------------------------
B = 2
S = 8
D_MODEL = 32
H_Q = 4
H_KV = 1
D_HEAD = D_MODEL // H_Q            # 8
G = H_Q // H_KV                    # GQA group size (4)
D_QKV = (H_Q + 2 * H_KV) * D_HEAD  # 48
D_FF = 64
N_EXPERTS = 4
TOPK = 2
EPS = 1e-8                         # matches RMSNorm(eps=1e-08)
NEG_BIG = -1e30                    # plain Python float (NOT a jnp array)
EFF = N_EXPERTS * D_FF             # 256 (lane-dense expert-stacked width)

# De-interleave permutation applied host-side to the q/k columns of Wqkv so the
# kernel can use "half"-style RoPE (contiguous half swap + sign flip) on the
# VPU.  q.k inner products are permutation invariant and v is untouched, so
# this is mathematically identical to the interleaved reference.
_DEINT = np.concatenate([np.arange(0, D_HEAD, 2), np.arange(1, D_HEAD, 2)])
_QKV_COL_PERM = np.concatenate(
    [h * D_HEAD + _DEINT for h in range(H_Q)]
    + [H_Q * D_HEAD + j * D_HEAD + _DEINT for j in range(H_KV)]
    + [np.arange((H_Q + H_KV) * D_HEAD, D_QKV)]          # v columns unchanged
).astype(np.int32)

# gate-expansion matrix: (E, E*D_FF) with ones on expert e's lane block.
_EXPAND = np.zeros((N_EXPERTS, EFF), np.float32)
for _e in range(N_EXPERTS):
    _EXPAND[_e, _e * D_FF:(_e + 1) * D_FF] = 1.0


# ------------------------------ fused Pallas kernel ----------------------------
def encoder_layer_kernel(x_ref, wqkv_ref, wo_ref, cos_ref, sin_ref, nrm1_ref,
                         wg_ref, expand_ref, w_ref, v_ref, w2_ref, nrm2_ref,
                         o_ref):
    x = x_ref[0]                                                   # (S, D_MODEL)

    # ----------------- self-attention (GQA, shared kv head) -------------------
    qkv = jnp.dot(x, wqkv_ref[...], preferred_element_type=jnp.float32)  # (S, D_QKV)

    half = D_HEAD // 2
    cos_q = cos_ref[...]                       # (H_Q*S, D_HEAD), "half" layout, tiled
    sin_q = sin_ref[...]
    cos_k = cos_q[:S]                          # first S rows == per-position table
    sin_k = sin_q[:S]

    def rope(t, c, s):                         # VPU-only RoPE (de-interleaved cols)
        rot = jnp.concatenate([-t[:, half:], t[:, :half]], axis=-1)
        return t * c + rot * s

    d_q = H_Q * D_HEAD
    # row-stack all query heads -> one RoPE pass, one score matmul, one P@V matmul
    q_stack = jnp.concatenate(
        [qkv[:, h * D_HEAD:(h + 1) * D_HEAD] for h in range(H_Q)], axis=0)
    q_stack = rope(q_stack, cos_q, sin_q)                          # (H_Q*S, D_HEAD)
    k = rope(qkv[:, d_q:d_q + D_HEAD], cos_k, sin_k)               # (S, D_HEAD)
    v = qkv[:, d_q + D_HEAD:d_q + 2 * D_HEAD]                      # (S, D_HEAD)

    scale = 1.0 / math.sqrt(D_HEAD)
    s = jnp.dot(q_stack, k.T, preferred_element_type=jnp.float32) * scale  # (H_Q*S, S)
    s = s - jnp.max(s, axis=-1, keepdims=True)
    p = jnp.exp(s)
    p = p / jnp.sum(p, axis=-1, keepdims=True)
    o_all = jnp.dot(p, v, preferred_element_type=jnp.float32)      # (H_Q*S, D_HEAD)

    # fold head-concat + Wo into a sum of per-head matmuls (no scratch scatter)
    att = jnp.zeros((S, D_MODEL), jnp.float32)
    for h in range(H_Q):
        att = att + jnp.dot(o_all[h * S:(h + 1) * S, :],
                            wo_ref[h * D_HEAD:(h + 1) * D_HEAD, :],
                            preferred_element_type=jnp.float32)

    # ----------------- add & RMSNorm 1 ----------------------------------------
    y = att + x
    y = y * jax.lax.rsqrt(jnp.mean(y * y, axis=-1, keepdims=True) + EPS) * nrm1_ref[...]

    # ----------------- top-k gating (torch.topk-compatible tie-break) ---------
    logits = jnp.dot(y, wg_ref[...], preferred_element_type=jnp.float32)  # (S, E)
    col = jax.lax.broadcasted_iota(jnp.int32, logits.shape, 1)

    remaining = logits
    masks, vals = [], []
    for _ in range(TOPK):
        m = jnp.max(remaining, axis=-1, keepdims=True)             # (S, 1)
        eq = remaining == m
        first_idx = jnp.min(jnp.where(eq, col, N_EXPERTS), axis=-1, keepdims=True)
        sel = col == first_idx                                     # exactly one per row
        masks.append(sel)
        vals.append(m)
        remaining = jnp.where(sel, NEG_BIG, remaining)

    # softmax over the TOPK selected logits (vals[0] is the largest -> stable)
    exps = [jnp.exp(vv - vals[0]) for vv in vals]
    denom = exps[0]
    for e in exps[1:]:
        denom = denom + e
    inv = 1.0 / denom
    gate = jnp.zeros_like(logits)
    for kk in range(TOPK):
        gate = gate + (exps[kk] * inv) * masks[kk].astype(jnp.float32)    # (S, E)

    # ----------------- expert-stacked SwiGLU MoE (3 lane-dense matmuls) -------
    h_all = jnp.dot(y, w_ref[...], preferred_element_type=jnp.float32)    # (S, E*D_FF)
    g_all = jnp.dot(y, v_ref[...], preferred_element_type=jnp.float32)    # (S, E*D_FF)
    act = (h_all * (1.0 / (1.0 + jnp.exp(-h_all)))) * g_all               # SwiGLU
    gate_expand = jnp.dot(gate, expand_ref[...],
                          preferred_element_type=jnp.float32)             # (S, E*D_FF)
    ff = jnp.dot(act * gate_expand, w2_ref[...],
                 preferred_element_type=jnp.float32)                      # (S, D_MODEL)

    # ----------------- add & RMSNorm 2 ----------------------------------------
    z = ff + y
    z = z * jax.lax.rsqrt(jnp.mean(z * z, axis=-1, keepdims=True) + EPS) * nrm2_ref[...]
    o_ref[0] = z


# ----------------------------- pallas_call wrapper -----------------------------
def encoder_layer(x, p, cos, sin, expand):
    # host-side (XLA) layout prep: column-permute Wqkv for half-RoPE; stack the
    # expert weights lane-dense so the kernel runs the MoE as 3 big matmuls.
    wqkv = p["wqkv"][:, _QKV_COL_PERM]
    w_all = jnp.transpose(p["W"], (1, 0, 2)).reshape(D_MODEL, EFF)
    v_all = jnp.transpose(p["V"], (1, 0, 2)).reshape(D_MODEL, EFF)
    w2_all = p["W2"].reshape(EFF, D_MODEL)

    batch = x.shape[0]
    return pl.pallas_call(
        encoder_layer_kernel,
        out_shape=jax.ShapeDtypeStruct(x.shape, jnp.float32),
        grid=(batch,),
        in_specs=[
            pl.BlockSpec((1, S, D_MODEL), lambda b: (b, 0, 0)),            # x
            pl.BlockSpec((D_MODEL, D_QKV), lambda b: (0, 0)),              # Wqkv
            pl.BlockSpec((D_MODEL, D_MODEL), lambda b: (0, 0)),            # Wo
            pl.BlockSpec((H_Q * S, D_HEAD), lambda b: (0, 0)),             # cos (tiled)
            pl.BlockSpec((H_Q * S, D_HEAD), lambda b: (0, 0)),             # sin (tiled)
            pl.BlockSpec((1, D_MODEL), lambda b: (0, 0)),                  # mha_norm_w
            pl.BlockSpec((D_MODEL, N_EXPERTS), lambda b: (0, 0)),          # gate
            pl.BlockSpec((N_EXPERTS, EFF), lambda b: (0, 0)),              # gate expand
            pl.BlockSpec((D_MODEL, EFF), lambda b: (0, 0)),                # W stacked
            pl.BlockSpec((D_MODEL, EFF), lambda b: (0, 0)),                # V stacked
            pl.BlockSpec((EFF, D_MODEL), lambda b: (0, 0)),                # W2 stacked
            pl.BlockSpec((1, D_MODEL), lambda b: (0, 0)),                  # ffn_norm_w
        ],
        out_specs=pl.BlockSpec((1, S, D_MODEL), lambda b: (b, 0, 0)),
        compiler_params=pltpu.CompilerParams(dimension_semantics=("parallel",)),
    )(x, wqkv, p["wo"], cos, sin, p["mha_norm_w"],
      p["wg"], expand, w_all, v_all, w2_all, p["ffn_norm_w"])


# --------------------------- parameter / table setup ---------------------------
def rope_tables(seq, d_head, reps):
    # theta_i = 10000^(-2i/d_head); tables emitted in the "half" (de-interleaved)
    # layout matching the Wqkv column permutation, tiled `reps` times along rows
    # so the row-stacked (H_Q*S, D_HEAD) query slab can use it directly.
    exps = np.arange(0, d_head, 2, dtype=np.float32) / np.float32(d_head)
    theta = 1.0 / (10000.0 ** exps)                                  # (d_head//2,)
    ang = np.arange(seq, dtype=np.float32)[:, None] * theta[None, :]
    ang = np.concatenate([ang, ang], axis=1)                         # (seq, d_head)
    ang = np.tile(ang, (reps, 1))                                    # (reps*seq, d_head)
    return (jnp.asarray(np.cos(ang), jnp.float32),
            jnp.asarray(np.sin(ang), jnp.float32))


def init_params(key):
    ks = jax.random.split(key, 6)
    sc = 0.05
    return dict(
        wqkv=sc * jax.random.normal(ks[0], (D_MODEL, D_QKV), jnp.float32),
        wo=sc * jax.random.normal(ks[1], (D_MODEL, D_MODEL), jnp.float32),
        mha_norm_w=jnp.ones((1, D_MODEL), jnp.float32),
        ffn_norm_w=jnp.ones((1, D_MODEL), jnp.float32),
        wg=sc * jax.random.normal(ks[2], (D_MODEL, N_EXPERTS), jnp.float32),
        W=sc * jax.random.normal(ks[3], (N_EXPERTS, D_MODEL, D_FF), jnp.float32),
        V=sc * jax.random.normal(ks[4], (N_EXPERTS, D_MODEL, D_FF), jnp.float32),
        W2=sc * jax.random.normal(ks[5], (N_EXPERTS, D_FF, D_MODEL), jnp.float32),
    )


# ------------------------- pure-JAX reference (module spec) --------------------
def reference_encoder_layer(x, p):
    theta = 1.0 / (10000.0 ** (np.arange(0, D_HEAD, 2, dtype=np.float32) / D_HEAD))
    theta = np.repeat(theta, 2)                                      # interleaved
    ang = np.arange(S, dtype=np.float32)[:, None] * theta[None, :]   # (S, D_HEAD)
    cos = jnp.asarray(np.cos(ang), jnp.float32)
    sin = jnp.asarray(np.sin(ang), jnp.float32)

    def rot_half(t):                                                 # (..., D_HEAD)
        x1 = t[..., 0::2]
        x2 = t[..., 1::2]
        return jnp.stack([-x2, x1], axis=-1).reshape(t.shape)

    def rope(t):                                                     # (B, S, H, Dh)
        c = cos[None, :, None, :]
        s_ = sin[None, :, None, :]
        return t * c + rot_half(t) * s_

    qkv = jnp.einsum('bsd,de->bse', x, p["wqkv"])
    q = qkv[..., :D_MODEL].reshape(B, S, H_Q, D_HEAD)
    k = qkv[..., D_MODEL:D_MODEL + D_HEAD].reshape(B, S, H_KV, D_HEAD)
    v = qkv[..., D_MODEL + D_HEAD:].reshape(B, S, H_KV, D_HEAD)
    q, k = rope(q), rope(k)
    k = jnp.repeat(k, G, axis=2)
    v = jnp.repeat(v, G, axis=2)
    q, k, v = (t.transpose(0, 2, 1, 3) for t in (q, k, v))
    scores = jnp.einsum('bhqd,bhkd->bhqk', q, k) / math.sqrt(D_HEAD)
    pmat = jax.nn.softmax(scores, axis=-1)
    o = jnp.einsum('bhqk,bhkd->bhqd', pmat, v).transpose(0, 2, 1, 3).reshape(B, S, D_MODEL)
    att = jnp.einsum('bsd,de->bse', o, p["wo"])

    y = att + x
    y = y * jax.lax.rsqrt(jnp.mean(y * y, -1, keepdims=True) + EPS) * p["mha_norm_w"][0]

    logits = jnp.einsum('bsd,de->bse', y, p["wg"])
    wts, idxs = jax.lax.top_k(logits, TOPK)
    wts = jax.nn.softmax(wts, axis=-1)
    moe = jnp.zeros_like(y)
    for e in range(N_EXPERTS):
        h = jnp.einsum('bsd,df->bsf', y, p["W"][e])
        g = jnp.einsum('bsd,df->bsf', y, p["V"][e])
        ff = jnp.einsum('bsf,fd->bsd', jax.nn.silu(h) * g, p["W2"][e])
        gate_e = jnp.sum(jnp.where(idxs == e, wts, 0.0), axis=-1, keepdims=True)
        moe = moe + gate_e * ff
    z = moe + y
    z = z * jax.lax.rsqrt(jnp.mean(z * z, -1, keepdims=True) + EPS) * p["ffn_norm_w"][0]
    return z


# TODO(synk): training-mode attention dropout and the kv_cache decode path are not
# implemented (forward matches eval-mode, mask=None semantics).
# TODO(synk): at production sizes the expert stacks (W/V/W2) must be blocked over
# an expert grid axis with pl.Buffered(2) instead of full VMEM residency (v7x has
# only 64 MiB VMEM).

if __name__ == "__main__":
    key = jax.random.PRNGKey(0)
    kx, kp = jax.random.split(key)
    x = jax.random.normal(kx, (B, S, D_MODEL), jnp.float32)
    params = init_params(kp)
    cos, sin = rope_tables(S, D_HEAD, H_Q)
    expand = jnp.asarray(_EXPAND)

    out = jax.jit(encoder_layer)(x, params, cos, sin, expand)
    jax.block_until_ready(out)

    ref = reference_encoder_layer(x, params)
    assert out.shape == (B, S, D_MODEL)
    assert bool(jnp.all(jnp.isfinite(out)))
    np.testing.assert_allclose(np.asarray(out), np.asarray(ref), rtol=3e-5, atol=3e-5)
    print("KERNEL_OK")
</pallas_src>

<mosaic_0001>
module attributes {stable_mosaic.version = 11 : i64} {
  func.func @encoder_layer_kernel(%arg0: i32, %arg1: memref<1x8x32xf32, #tpu.memory_space<vmem>>, %arg2: memref<32x48xf32, #tpu.memory_space<vmem>>, %arg3: memref<32x32xf32, #tpu.memory_space<vmem>>, %arg4: memref<32x8xf32, #tpu.memory_space<vmem>>, %arg5: memref<32x8xf32, #tpu.memory_space<vmem>>, %arg6: memref<1x32xf32, #tpu.memory_space<vmem>>, %arg7: memref<32x4xf32, #tpu.memory_space<vmem>>, %arg8: memref<4x256xf32, #tpu.memory_space<vmem>>, %arg9: memref<32x256xf32, #tpu.memory_space<vmem>>, %arg10: memref<32x256xf32, #tpu.memory_space<vmem>>, %arg11: memref<256x32xf32, #tpu.memory_space<vmem>>, %arg12: memref<1x32xf32, #tpu.memory_space<vmem>>, %arg13: memref<1x8x32xf32, #tpu.memory_space<vmem>>) attributes {dimension_semantics = [#tpu.dimension_semantics<parallel>], iteration_bounds = array<i64: 2>, scalar_prefetch = 0 : i64, scratch_operands = 0 : i64, tpu.core_type = #tpu.core_type<tc>, window_params = [{transform_indices = @transform_0, window_bounds = array<i64: 1, 8, 32>}, {pipeline_mode = #tpu.pipeline_mode<synchronous>, transform_indices = @transform_1, window_bounds = array<i64: 32, 48>}, {pipeline_mode = #tpu.pipeline_mode<synchronous>, transform_indices = @transform_2, window_bounds = array<i64: 32, 32>}, {pipeline_mode = #tpu.pipeline_mode<synchronous>, transform_indices = @transform_3, window_bounds = array<i64: 32, 8>}, {pipeline_mode = #tpu.pipeline_mode<synchronous>, transform_indices = @transform_4, window_bounds = array<i64: 32, 8>}, {pipeline_mode = #tpu.pipeline_mode<synchronous>, transform_indices = @transform_5, window_bounds = array<i64: 1, 32>}, {pipeline_mode = #tpu.pipeline_mode<synchronous>, transform_indices = @transform_6, window_bounds = array<i64: 32, 4>}, {pipeline_mode = #tpu.pipeline_mode<synchronous>, transform_indices = @transform_7, window_bounds = array<i64: 4, 256>}, {pipeline_mode = #tpu.pipeline_mode<synchronous>, transform_indices = @transform_8, window_bounds = array<i64: 32, 256>}, {pipeline_mode = #tpu.pipeline_mode<synchronous>, transform_indices = @transform_9, window_bounds = array<i64: 32, 256>}, {pipeline_mode = #tpu.pipeline_mode<synchronous>, transform_indices = @transform_10, window_bounds = array<i64: 256, 32>}, {pipeline_mode = #tpu.pipeline_mode<synchronous>, transform_indices = @transform_11, window_bounds = array<i64: 1, 32>}, {transform_indices = @transform_12, window_bounds = array<i64: 1, 8, 32>}]} {
    %c0 = arith.constant 0 : index
    %c0_0 = arith.constant 0 : index
    %c0_1 = arith.constant 0 : index
    %0 = vector.load %arg1[%c0, %c0_0, %c0_1] : memref<1x8x32xf32, #tpu.memory_space<vmem>>, vector<1x8x32xf32>
    %1 = vector.shape_cast %0 : vector<1x8x32xf32> to vector<8x32xf32>
    %c0_2 = arith.constant 0 : index
    %c0_3 = arith.constant 0 : index
    %2 = vector.load %arg2[%c0_2, %c0_3] : memref<32x48xf32, #tpu.memory_space<vmem>>, vector<32x48xf32>
    %cst = arith.constant dense<0.000000e+00> : vector<8x48xf32>
    %3 = tpu.matmul %1, %2, %cst {dimension_numbers = #tpu.dot_dimension_numbers<[1], [0], [0], [1], [0, 0, 1, 1], [], []>} : vector<8x32xf32>, vector<32x48xf32>, vector<8x48xf32> -> vector<8x48xf32>
    %c0_4 = arith.constant 0 : index
    %c0_5 = arith.constant 0 : index
    %4 = vector.load %arg4[%c0_4, %c0_5] : memref<32x8xf32, #tpu.memory_space<vmem>>, vector<32x8xf32>
    %c0_6 = arith.constant 0 : index
    %c0_7 = arith.constant 0 : index
    %5 = vector.load %arg5[%c0_6, %c0_7] : memref<32x8xf32, #tpu.memory_space<vmem>>, vector<32x8xf32>
    %6 = vector.extract_strided_slice %4 {offsets = [0, 0], sizes = [8, 8], strides = [1, 1]} : vector<32x8xf32> to vector<8x8xf32>
    %7 = vector.extract_strided_slice %5 {offsets = [0, 0], sizes = [8, 8], strides = [1, 1]} : vector<32x8xf32> to vector<8x8xf32>
    %8 = vector.extract_strided_slice %3 {offsets = [0, 0], sizes = [8, 8], strides = [1, 1]} : vector<8x48xf32> to vector<8x8xf32>
    %9 = vector.extract_strided_slice %3 {offsets = [0, 8], sizes = [8, 8], strides = [1, 1]} : vector<8x48xf32> to vector<8x8xf32>
    %10 = vector.extract_strided_slice %3 {offsets = [0, 16], sizes = [8, 8], strides = [1, 1]} : vector<8x48xf32> to vector<8x8xf32>
    %11 = vector.extract_strided_slice %3 {offsets = [0, 24], sizes = [8, 8], strides = [1, 1]} : vector<8x48xf32> to vector<8x8xf32>
    %12 = tpu.concatenate %8, %9, %10, %11 in 0 : vector<8x8xf32>, vector<8x8xf32>, vector<8x8xf32>, vector<8x8xf32> -> vector<32x8xf32>
    %13 = vector.extract_strided_slice %12 {offsets = [0, 4], sizes = [32, 4], strides = [1, 1]} : vector<32x8xf32> to vector<32x4xf32>
    %cst_8 = arith.constant 0.000000e+00 : f32
    %14 = vector.broadcast %cst_8 : f32 to vector<32x4xf32>
    %15 = arith.subf %14, %13 : vector<32x4xf32>
    %16 = vector.extract_strided_slice %12 {offsets = [0, 0], sizes = [32, 4], strides = [1, 1]} : vector<32x8xf32> to vector<32x4xf32>
    %17 = tpu.concatenate %15, %16 in 1 : vector<32x4xf32>, vector<32x4xf32> -> vector<32x8xf32>
    %18 = arith.mulf %12, %4 : vector<32x8xf32>
    %19 = arith.mulf %17, %5 : vector<32x8xf32>
    %20 = arith.addf %18, %19 : vector<32x8xf32>
    %21 = vector.extract_strided_slice %3 {offsets = [0, 32], sizes = [8, 8], strides = [1, 1]} : vector<8x48xf32> to vector<8x8xf32>
    %22 = vector.extract_strided_slice %21 {offsets = [0, 4], sizes = [8, 4], strides = [1, 1]} : vector<8x8xf32> to vector<8x4xf32>
    %cst_9 = arith.constant 0.000000e+00 : f32
    %23 = vector.broadcast %cst_9 : f32 to vector<8x4xf32>
    %24 = arith.subf %23, %22 : vector<8x4xf32>
    %25 = vector.extract_strided_slice %21 {offsets = [0, 0], sizes = [8, 4], strides = [1, 1]} : vector<8x8xf32> to vector<8x4xf32>
    %26 = tpu.concatenate %24, %25 in 1 : vector<8x4xf32>, vector<8x4xf32> -> vector<8x8xf32>
    %27 = arith.mulf %21, %6 : vector<8x8xf32>
    %28 = arith.mulf %26, %7 : vector<8x8xf32>
    %29 = arith.addf %27, %28 : vector<8x8xf32>
    %30 = vector.extract_strided_slice %3 {offsets = [0, 40], sizes = [8, 8], strides = [1, 1]} : vector<8x48xf32> to vector<8x8xf32>
    %31 = tpu.transpose %29, [1, 0] : vector<8x8xf32> -> vector<8x8xf32>
    %cst_10 = arith.constant dense<0.000000e+00> : vector<32x8xf32>
    %32 = tpu.matmul %20, %31, %cst_10 {dimension_numbers = #tpu.dot_dimension_numbers<[1], [0], [0], [1], [0, 0, 1, 1], [], []>} : vector<32x8xf32>, vector<8x8xf32>, vector<32x8xf32> -> vector<32x8xf32>
    %cst_11 = arith.constant 0.353553385 : f32
    %33 = vector.broadcast %cst_11 : f32 to vector<32x8xf32>
    %34 = arith.mulf %32, %33 : vector<32x8xf32>
    %cst_12 = arith.constant dense<0xFF800000> : vector<32xf32>
    %35 = vector.multi_reduction <maximumf>, %34, %cst_12 [1] : vector<32x8xf32> to vector<32xf32>
    %36 = vector.shape_cast %35 : vector<32xf32> to vector<32x1xf32>
    %37 = vector.broadcast %36 : vector<32x1xf32> to vector<32x8xf32>
    %38 = arith.subf %34, %37 : vector<32x8xf32>
    %39 = math.exp %38 : vector<32x8xf32>
    %cst_13 = arith.constant dense<0.000000e+00> : vector<32xf32>
    %40 = vector.multi_reduction <add>, %39, %cst_13 [1] : vector<32x8xf32> to vector<32xf32>
    %41 = vector.shape_cast %40 : vector<32xf32> to vector<32x1xf32>
    %42 = vector.broadcast %41 : vector<32x1xf32> to vector<32x8xf32>
    %43 = arith.divf %39, %42 : vector<32x8xf32>
    %cst_14 = arith.constant dense<0.000000e+00> : vector<32x8xf32>
    %44 = tpu.matmul %43, %30, %cst_14 {dimension_numbers = #tpu.dot_dimension_numbers<[1], [0], [0], [1], [0, 0, 1, 1], [], []>} : vector<32x8xf32>, vector<8x8xf32>, vector<32x8xf32> -> vector<32x8xf32>
    %cst_15 = arith.constant 0.000000e+00 : f32
    %45 = vector.broadcast %cst_15 : f32 to vector<8x32xf32>
    %46 = vector.extract_strided_slice %44 {offsets = [0, 0], sizes = [8, 8], strides = [1, 1]} : vector<32x8xf32> to vector<8x8xf32>
    %c0_16 = arith.constant 0 : index
    %c0_17 = arith.constant 0 : index
    %47 = vector.load %arg3[%c0_16, %c0_17] : memref<32x32xf32, #tpu.memory_space<vmem>>, vector<8x32xf32>
    %cst_18 = arith.constant dense<0.000000e+00> : vector<8x32xf32>
    %48 = tpu.matmul %46, %47, %cst_18 {dimension_numbers = #tpu.dot_dimension_numbers<[1], [0], [0], [1], [0, 0, 1, 1], [], []>} : vector<8x8xf32>, vector<8x32xf32>, vector<8x32xf32> -> vector<8x32xf32>
    %49 = arith.addf %45, %48 : vector<8x32xf32>
    %50 = vector.extract_strided_slice %44 {offsets = [8, 0], sizes = [8, 8], strides = [1, 1]} : vector<32x8xf32> to vector<8x8xf32>
    %c8 = arith.constant 8 : index
    %c0_19 = arith.constant 0 : index
    %51 = vector.load %arg3[%c8, %c0_19] : memref<32x32xf32, #tpu.memory_space<vmem>>, vector<8x32xf32>
    %cst_20 = arith.constant dense<0.000000e+00> : vector<8x32xf32>
    %52 = tpu.matmul %50, %51, %cst_20 {dimension_numbers = #tpu.dot_dimension_numbers<[1], [0], [0], [1], [0, 0, 1, 1], [], []>} : vector<8x8xf32>, vector<8x32xf32>, vector<8x32xf32> -> vector<8x32xf32>
    %53 = arith.addf %49, %52 : vector<8x32xf32>
    %54 = vector.extract_strided_slice %44 {offsets = [16, 0], sizes = [8, 8], strides = [1, 1]} : vector<32x8xf32> to vector<8x8xf32>
    %c16 = arith.constant 16 : index
    %c0_21 = arith.constant 0 : index
    %55 = vector.load %arg3[%c16, %c0_21] : memref<32x32xf32, #tpu.memory_space<vmem>>, vector<8x32xf32>
    %cst_22 = arith.constant dense<0.000000e+00> : vector<8x32xf32>
    %56 = tpu.matmul %54, %55, %cst_22 {dimension_numbers = #tpu.dot_dimension_numbers<[1], [0], [0], [1], [0, 0, 1, 1], [], []>} : vector<8x8xf32>, vector<8x32xf32>, vector<8x32xf32> -> vector<8x32xf32>
    %57 = arith.addf %53, %56 : vector<8x32xf32>
    %58 = vector.extract_strided_slice %44 {offsets = [24, 0], sizes = [8, 8], strides = [1, 1]} : vector<32x8xf32> to vector<8x8xf32>
    %c24 = arith.constant 24 : index
    %c0_23 = arith.constant 0 : index
    %59 = vector.load %arg3[%c24, %c0_23] : memref<32x32xf32, #tpu.memory_space<vmem>>, vector<8x32xf32>
    %cst_24 = arith.constant dense<0.000000e+00> : vector<8x32xf32>
    %60 = tpu.matmul %58, %59, %cst_24 {dimension_numbers = #tpu.dot_dimension_numbers<[1], [0], [0], [1], [0, 0, 1, 1], [], []>} : vector<8x8xf32>, vector<8x32xf32>, vector<8x32xf32> -> vector<8x32xf32>
    %61 = arith.addf %57, %60 : vector<8x32xf32>
    %62 = arith.addf %61, %1 : vector<8x32xf32>
    %63 = arith.mulf %62, %62 : vector<8x32xf32>
    %cst_25 = arith.constant dense<0.000000e+00> : vector<8xf32>
    %64 = vector.multi_reduction <add>, %63, %cst_25 [1] : vector<8x32xf32> to vector<8xf32>
    %65 = vector.shape_cast %64 : vector<8xf32> to vector<8x1xf32>
    %cst_26 = arith.constant 3.200000e+01 : f32
    %66 = vector.broadcast %cst_26 : f32 to vector<8x1xf32>
    %67 = arith.divf %65, %66 : vector<8x1xf32>
    %cst_27 = arith.constant 9.99999993E-9 : f32
    %68 = vector.broadcast %cst_27 : f32 to vector<8x1xf32>
    %69 = arith.addf %67, %68 : vector<8x1xf32>
    %70 = math.rsqrt %69 : vector<8x1xf32>
    %71 = vector.broadcast %70 : vector<8x1xf32> to vector<8x32xf32>
    %72 = arith.mulf %62, %71 : vector<8x32xf32>
    %c0_28 = arith.constant 0 : index
    %c0_29 = arith.constant 0 : index
    %73 = vector.load %arg6[%c0_28, %c0_29] : memref<1x32xf32, #tpu.memory_space<vmem>>, vector<1x32xf32>
    %74 = vector.broadcast %73 : vector<1x32xf32> to vector<8x32xf32>
    %75 = arith.mulf %72, %74 : vector<8x32xf32>
    %c0_30 = arith.constant 0 : index
    %c0_31 = arith.constant 0 : index
    %76 = vector.load %arg7[%c0_30, %c0_31] : memref<32x4xf32, #tpu.memory_space<vmem>>, vector<32x4xf32>
    %cst_32 = arith.constant dense<0.000000e+00> : vector<8x4xf32>
    %77 = tpu.matmul %75, %76, %cst_32 {dimension_numbers = #tpu.dot_dimension_numbers<[1], [0], [0], [1], [0, 0, 1, 1], [], []>} : vector<8x32xf32>, vector<32x4xf32>, vector<8x4xf32> -> vector<8x4xf32>
    %78 = tpu.iota {dimensions = array<i32: 1>} : vector<8x4xi32>
    %cst_33 = arith.constant dense<0xFF800000> : vector<8xf32>
    %79 = vector.multi_reduction <maximumf>, %77, %cst_33 [1] : vector<8x4xf32> to vector<8xf32>
    %80 = vector.shape_cast %79 : vector<8xf32> to vector<8x1xf32>
    %81 = vector.broadcast %80 : vector<8x1xf32> to vector<8x4xf32>
    %82 = arith.cmpf oeq, %77, %81 : vector<8x4xf32>
    %c4_i32 = arith.constant 4 : i32
    %83 = vector.broadcast %c4_i32 : i32 to vector<8x4xi32>
    %84 = arith.select %82, %78, %83 : vector<8x4xi1>, vector<8x4xi32>
    %cst_34 = arith.constant dense<2147483647> : vector<8xi32>
    %85 = vector.multi_reduction <minsi>, %84, %cst_34 [1] : vector<8x4xi32> to vector<8xi32>
    %86 = vector.shape_cast %85 : vector<8xi32> to vector<8x1xi32>
    %87 = vector.broadcast %86 : vector<8x1xi32> to vector<8x4xi32>
    %88 = arith.cmpi eq, %78, %87 : vector<8x4xi32>
    %cst_35 = arith.constant -1.000000e+30 : f32
    %89 = vector.broadcast %cst_35 : f32 to vector<8x4xf32>
    %90 = arith.select %88, %89, %77 : vector<8x4xi1>, vector<8x4xf32>
    %cst_36 = arith.constant dense<0xFF800000> : vector<8xf32>
    %91 = vector.multi_reduction <maximumf>, %90, %cst_36 [1] : vector<8x4xf32> to vector<8xf32>
    %92 = vector.shape_cast %91 : vector<8xf32> to vector<8x1xf32>
    %93 = vector.broadcast %92 : vector<8x1xf32> to vector<8x4xf32>
    %94 = arith.cmpf oeq, %90, %93 : vector<8x4xf32>
    %c4_i32_37 = arith.constant 4 : i32
    %95 = vector.broadcast %c4_i32_37 : i32 to vector<8x4xi32>
    %96 = arith.select %94, %78, %95 : vector<8x4xi1>, vector<8x4xi32>
    %cst_38 = arith.constant dense<2147483647> : vector<8xi32>
    %97 = vector.multi_reduction <minsi>, %96, %cst_38 [1] : vector<8x4xi32> to vector<8xi32>
    %98 = vector.shape_cast %97 : vector<8xi32> to vector<8x1xi32>
    %99 = vector.broadcast %98 : vector<8x1xi32> to vector<8x4xi32>
    %100 = arith.cmpi eq, %78, %99 : vector<8x4xi32>
    %101 = arith.subf %80, %80 : vector<8x1xf32>
    %102 = math.exp %101 : vector<8x1xf32>
    %103 = arith.subf %92, %80 : vector<8x1xf32>
    %104 = math.exp %103 : vector<8x1xf32>
    %105 = arith.addf %102, %104 : vector<8x1xf32>
    %cst_39 = arith.constant 1.000000e+00 : f32
    %106 = vector.broadcast %cst_39 : f32 to vector<8x1xf32>
    %107 = arith.divf %106, %105 : vector<8x1xf32>
    %cst_40 = arith.constant 0.000000e+00 : f32
    %108 = vector.broadcast %cst_40 : f32 to vector<8x4xf32>
    %109 = arith.mulf %102, %107 : vector<8x1xf32>
    %110 = arith.extui %88 : vector<8x4xi1> to vector<8x4xi32>
    %111 = arith.sitofp %110 : vector<8x4xi32> to vector<8x4xf32>
    %112 = vector.broadcast %109 : vector<8x1xf32> to vector<8x4xf32>
    %113 = arith.mulf %112, %111 : vector<8x4xf32>
    %114 = arith.addf %108, %113 : vector<8x4xf32>
    %115 = arith.mulf %104, %107 : vector<8x1xf32>
    %116 = arith.extui %100 : vector<8x4xi1> to vector<8x4xi32>
    %117 = arith.sitofp %116 : vector<8x4xi32> to vector<8x4xf32>
    %118 = vector.broadcast %115 : vector<8x1xf32> to vector<8x4xf32>
    %119 = arith.mulf %118, %117 : vector<8x4xf32>
    %120 = arith.addf %114, %119 : vector<8x4xf32>
    %c0_41 = arith.constant 0 : index
    %c0_42 = arith.constant 0 : index
    %121 = vector.load %arg9[%c0_41, %c0_42] : memref<32x256xf32, #tpu.memory_space<vmem>>, vector<32x256xf32>
    %cst_43 = arith.constant dense<0.000000e+00> : vector<8x256xf32>
    %122 = tpu.matmul %75, %121, %cst_43 {dimension_numbers = #tpu.dot_dimension_numbers<[1], [0], [0], [1], [0, 0, 1, 1], [], []>} : vector<8x32xf32>, vector<32x256xf32>, vector<8x256xf32> -> vector<8x256xf32>
    %c0_44 = arith.constant 0 : index
    %c0_45 = arith.constant 0 : index
    %123 = vector.load %arg10[%c0_44, %c0_45] : memref<32x256xf32, #tpu.memory_space<vmem>>, vector<32x256xf32>
    %cst_46 = arith.constant dense<0.000000e+00> : vector<8x256xf32>
    %124 = tpu.matmul %75, %123, %cst_46 {dimension_numbers = #tpu.dot_dimension_numbers<[1], [0], [0], [1], [0, 0, 1, 1], [], []>} : vector<8x32xf32>, vector<32x256xf32>, vector<8x256xf32> -> vector<8x256xf32>
    %cst_47 = arith.constant 0.000000e+00 : f32
    %125 = vector.broadcast %cst_47 : f32 to vector<8x256xf32>
    %126 = arith.subf %125, %122 : vector<8x256xf32>
    %127 = math.exp %126 : vector<8x256xf32>
    %cst_48 = arith.constant 1.000000e+00 : f32
    %128 = vector.broadcast %cst_48 : f32 to vector<8x256xf32>
    %129 = arith.addf %128, %127 : vector<8x256xf32>
    %cst_49 = arith.constant 1.000000e+00 : f32
    %130 = vector.broadcast %cst_49 : f32 to vector<8x256xf32>
    %131 = arith.divf %130, %129 : vector<8x256xf32>
    %132 = arith.mulf %122, %131 : vector<8x256xf32>
    %133 = arith.mulf %132, %124 : vector<8x256xf32>
    %c0_50 = arith.constant 0 : index
    %c0_51 = arith.constant 0 : index
    %134 = vector.load %arg8[%c0_50, %c0_51] : memref<4x256xf32, #tpu.memory_space<vmem>>, vector<4x256xf32>
    %cst_52 = arith.constant dense<0.000000e+00> : vector<8x256xf32>
    %135 = tpu.matmul %120, %134, %cst_52 {dimension_numbers = #tpu.dot_dimension_numbers<[1], [0], [0], [1], [0, 0, 1, 1], [], []>} : vector<8x4xf32>, vector<4x256xf32>, vector<8x256xf32> -> vector<8x256xf32>
    %136 = arith.mulf %133, %135 : vector<8x256xf32>
    %c0_53 = arith.constant 0 : index
    %c0_54 = arith.constant 0 : index
    %137 = vector.load %arg11[%c0_53, %c0_54] : memref<256x32xf32, #tpu.memory_space<vmem>>, vector<256x32xf32>
    %cst_55 = arith.constant dense<0.000000e+00> : vector<8x32xf32>
    %138 = tpu.matmul %136, %137, %cst_55 {dimension_numbers = #tpu.dot_dimension_numbers<[1], [0], [0], [1], [0, 0, 1, 1], [], []>} : vector<8x256xf32>, vector<256x32xf32>, vector<8x32xf32> -> vector<8x32xf32>
    %139 = arith.addf %138, %75 : vector<8x32xf32>
    %140 = arith.mulf %139, %139 : vector<8x32xf32>
    %cst_56 = arith.constant dense<0.000000e+00> : vector<8xf32>
    %141 = vector.multi_reduction <add>, %140, %cst_56 [1] : vector<8x32xf32> to vector<8xf32>
    %142 = vector.shape_cast %141 : vector<8xf32> to vector<8x1xf32>
    %cst_57 = arith.constant 3.200000e+01 : f32
    %143 = vector.broadcast %cst_57 : f32 to vector<8x1xf32>
    %144 = arith.divf %142, %143 : vector<8x1xf32>
    %cst_58 = arith.constant 9.99999993E-9 : f32
    %145 = vector.broadcast %cst_58 : f32 to vector<8x1xf32>
    %146 = arith.addf %144, %145 : vector<8x1xf32>
    %147 = math.rsqrt %146 : vector<8x1xf32>
    %148 = vector.broadcast %147 : vector<8x1xf32> to vector<8x32xf32>
    %149 = arith.mulf %139, %148 : vector<8x32xf32>
    %c0_59 = arith.constant 0 : index
    %c0_60 = arith.constant 0 : index
    %150 = vector.load %arg12[%c0_59, %c0_60] : memref<1x32xf32, #tpu.memory_space<vmem>>, vector<1x32xf32>
    %151 = vector.broadcast %150 : vector<1x32xf32> to vector<8x32xf32>
    %152 = arith.mulf %149, %151 : vector<8x32xf32>
    %c0_61 = arith.constant 0 : index
    %c0_62 = arith.constant 0 : index
    %c0_63 = arith.constant 0 : index
    %153 = vector.load %arg13[%c0_61, %c0_62, %c0_63] : memref<1x8x32xf32, #tpu.memory_space<vmem>>, vector<1x8x32xf32>
    %154 = vector.shape_cast %153 : vector<1x8x32xf32> to vector<8x32xf32>
    %155 = vector.shape_cast %152 : vector<8x32xf32> to vector<1x8x32xf32>
    tpu.vector_store %arg13[%c0_61, %c0_62, %c0_63], %155 {strides = array<i32>} : memref<1x8x32xf32, #tpu.memory_space<vmem>>, vector<1x8x32xf32>,
    return
  }
  func.func @transform_0(%arg0: i32) -> (i32, i32, i32) {
    %c0_i32 = arith.constant 0 : i32
    %c0_i32_0 = arith.constant 0 : i32
    %c0_i32_1 = arith.constant 0 : i32
    return %arg0, %c0_i32, %c0_i32_0 : i32, i32, i32
  }
  func.func @transform_1(%arg0: i32) -> (i32, i32) {
    %c0_i32 = arith.constant 0 : i32
    %c0_i32_0 = arith.constant 0 : i32
    %c0_i32_1 = arith.constant 0 : i32
    return %c0_i32, %c0_i32_0 : i32, i32
  }
  func.func @transform_2(%arg0: i32) -> (i32, i32) {
    %c0_i32 = arith.constant 0 : i32
    %c0_i32_0 = arith.constant 0 : i32
    %c0_i32_1 = arith.constant 0 : i32
    return %c0_i32, %c0_i32_0 : i32, i32
  }
  func.func @transform_3(%arg0: i32) -> (i32, i32) {
    %c0_i32 = arith.constant 0 : i32
    %c0_i32_0 = arith.constant 0 : i32
    %c0_i32_1 = arith.constant 0 : i32
    return %c0_i32, %c0_i32_0 : i32, i32
  }
  func.func @transform_4(%arg0: i32) -> (i32, i32) {
    %c0_i32 = arith.constant 0 : i32
    %c0_i32_0 = arith.constant 0 : i32
    %c0_i32_1 = arith.constant 0 : i32
    return %c0_i32, %c0_i32_0 : i32, i32
  }
  func.func @transform_5(%arg0: i32) -> (i32, i32) {
    %c0_i32 = arith.constant 0 : i32
    %c0_i32_0 = arith.constant 0 : i32
    %c0_i32_1 = arith.constant 0 : i32
    return %c0_i32, %c0_i32_0 : i32, i32
  }
  func.func @transform_6(%arg0: i32) -> (i32, i32) {
    %c0_i32 = arith.constant 0 : i32
    %c0_i32_0 = arith.constant 0 : i32
    %c0_i32_1 = arith.constant 0 : i32
    return %c0_i32, %c0_i32_0 : i32, i32
  }
  func.func @transform_7(%arg0: i32) -> (i32, i32) {
    %c0_i32 = arith.constant 0 : i32
    %c0_i32_0 = arith.constant 0 : i32
    %c0_i32_1 = arith.constant 0 : i32
    return %c0_i32, %c0_i32_0 : i32, i32
  }
  func.func @transform_8(%arg0: i32) -> (i32, i32) {
    %c0_i32 = arith.constant 0 : i32
    %c0_i32_0 = arith.constant 0 : i32
    %c0_i32_1 = arith.constant 0 : i32
    return %c0_i32, %c0_i32_0 : i32, i32
  }
  func.func @transform_9(%arg0: i32) -> (i32, i32) {
    %c0_i32 = arith.constant 0 : i32
    %c0_i32_0 = arith.constant 0 : i32
    %c0_i32_1 = arith.constant 0 : i32
    return %c0_i32, %c0_i32_0 : i32, i32
  }
  func.func @transform_10(%arg0: i32) -> (i32, i32) {
    %c0_i32 = arith.constant 0 : i32
    %c0_i32_0 = arith.constant 0 : i32
    %c0_i32_1 = arith.constant 0 : i32
    return %c0_i32, %c0_i32_0 : i32, i32
  }
  func.func @transform_11(%arg0: i32) -> (i32, i32) {
    %c0_i32 = arith.constant 0 : i32
    %c0_i32_0 = arith.constant 0 : i32
    %c0_i32_1 = arith.constant 0 : i32
    return %c0_i32, %c0_i32_0 : i32, i32
  }
  func.func @transform_12(%arg0: i32) -> (i32, i32, i32) {
    %c0_i32 = arith.constant 0 : i32
    %c0_i32_0 = arith.constant 0 : i32
    %c0_i32_1 = arith.constant 0 : i32
    return %arg0, %c0_i32, %c0_i32_0 : i32, i32, i32
  }
}

</mosaic_0001>

<llo_original>
// kernel: encoder_layer.1
$region0: #{encoder_layer.1}
  #allocation0 [shape = 'u32[]', space=smem, size = 0x4, offset = 0x4, fixed_abs, tag = 'smem constant byte address 0x4 - core index']
  #allocation1 [shape = 'u32[144,128]{1,0:T(1,128)}', space=vmem, size = 0x12000, scoped, tag = 'internal scratch']
  %s0 = inlined_call_operand.vmem [shape: f32[2,8,32], index: 0, kind: input, shape index: {}]
  %s1 = inlined_call_operand.vmem [shape: f32[32,48], index: 1, kind: input, shape index: {}]
  %s2 = inlined_call_operand.vmem [shape: f32[32,32], index: 2, kind: input, shape index: {}]
  %s3 = inlined_call_operand.vmem [shape: f32[32,8], index: 3, kind: input, shape index: {}]
  %s4 = inlined_call_operand.vmem [shape: f32[32,8], index: 4, kind: input, shape index: {}]
  %s5 = inlined_call_operand.vmem [shape: f32[1,32], index: 5, kind: input, shape index: {}]
  %s6 = inlined_call_operand.vmem [shape: f32[32,4], index: 6, kind: input, shape index: {}]
  %s7 = inlined_call_operand.vmem [shape: f32[4,256], index: 7, kind: input, shape index: {}]
  %s8 = inlined_call_operand.vmem [shape: f32[32,256], index: 8, kind: input, shape index: {}]
  %s9 = inlined_call_operand.vmem [shape: f32[32,256], index: 9, kind: input, shape index: {}]
  %s10 = inlined_call_operand.vmem [shape: f32[256,32], index: 10, kind: input, shape index: {}]
  %s11 = inlined_call_operand.vmem [shape: f32[1,32], index: 11, kind: input, shape index: {}]
  %s12 = inlined_call_operand.hbm [shape: f32[2,8,32], index: 12, kind: output, shape index: {}]
  %s13 = sld [smem:[#allocation0]]
  $region81: #{encoder_layer.1} parent=0
    _
  %s15 = ssub.s32 1, %s13
  %s16 = scalar_select 0, %s15, %s13
  $region1: #{encoder_layer.1} parent=0
    #allocation2 [shape = 'u8[8192]{0}', space=vmem, size = 0x2000, scoped, tag = 'output window, operand 0']
    #allocation3 [shape = 's32[2]{0}', space=sflag, size = 0x8, scoped, tag = 'scoped memory for encoder_layer.1']
    %17 = vsyncpa [#allocation3], 0
    %s18 = scalar_lea.sflag [#allocation3], 1
    %19 = vsyncpa %s18, 0
    loop: start=0, step=1, limit=4
    $region2: #{encoder_layer.1} parent=1 // loop_pre_header
      _
    $region3: #{encoder_layer.1} parent=1 // loop_header
      %s21 = sphi 0, %s25
      %p22 = scmp.ge.s32.totalorder %s21, 4
      %s31 = sphi 0, %s33
      %s34 = sphi 0, %s31
      %s35 = sphi 0, %s34
      %s51 = sphi 0, %s35
      %s55 = sphi 0, %s55
      %s57 = sphi 0, %s55
      %s58 = sphi 0, %s57
      %s72 = sphi 0, %s58
      %s76 = sphi 0, %s76
      %s78 = sphi 0, %s76
      %s79 = sphi 0, %s78
      %s93 = sphi 0, %s79
      %s97 = sphi 0, %s97
      %s99 = sphi 0, %s97
      %s100 = sphi 0, %s99
      %s114 = sphi 0, %s100
      %s118 = sphi 0, %s118
      %s120 = sphi 0, %s118
      %s121 = sphi 0, %s120
      %s135 = sphi 0, %s121
      %s139 = sphi 0, %s139
      %s141 = sphi 0, %s139
      %s142 = sphi 0, %s141
      %s156 = sphi 0, %s142
      %s160 = sphi 0, %s160
      %s162 = sphi 0, %s160
      %s163 = sphi 0, %s162
      %s177 = sphi 0, %s163
      %s181 = sphi 0, %s181
      %s183 = sphi 0, %s181
      %s184 = sphi 0, %s183
      %s198 = sphi 0, %s184
      %s202 = sphi 0, %s202
      %s204 = sphi 0, %s202
      %s205 = sphi 0, %s204
      %s219 = sphi 0, %s205
      %s223 = sphi 0, %s223
      %s225 = sphi 0, %s223
      %s226 = sphi 0, %s225
      %s240 = sphi 0, %s226
      %s244 = sphi 0, %s244
      %s246 = sphi 0, %s244
      %s247 = sphi 0, %s246
      %s261 = sphi 0, %s247
      %s265 = sphi 0, %s265
      %s267 = sphi 0, %s265
      %s268 = sphi 0, %s267
      %s282 = sphi 0, %s268
      %s288 = sphi 0, %s290
      %s291 = sphi 0, %s288
      %s292 = sphi 0, %s291
      %s308 = sphi 0, %s292
    $region4: #{encoder_layer.1} parent=1 // loop_header_branch
      %24 = sbr.rel (%p22) target = $region8
    $region5: #{encoder_layer.1} parent=1 // loop_body
      %s26 = ssub.s32 %s21, 1
      %s27 = ssub.s32 %s21, 2
      %s28 = sadd.s32 %s21, 1
      %s29 = ssub.s32 %s21, %s28
      %p30 = scmp.eq.s32.totalorder %s29, 0
      %s32 = sadd.s32 %s31, 1
      %s33 = scalar_select %p30, %s31, %s32
      %p36 = pneg %p30
      %p37 = scmp.eq.s32.totalorder %s21, 1
      %p38 = por %p36, %p37
      %p39 = scmp.ne.s32.totalorder %s31, %s34
      %p40 = scmp.eq.s32.totalorder %s21, 0
      %p41 = por %p39, %p40
      %p42 = scmp.ne.s32.totalorder %s31, %s34
      %p43 = scmp.eq.s32.totalorder %s26, 1
      %p44 = por %p42, %p43
      %p45 = scmp.ne.s32.totalorder %s34, %s35
      %p46 = scmp.eq.s32.totalorder %s26, 0
      %p47 = por %p45, %p46
      %p48 = scmp.ne.s32.totalorder %s34, %s35
      %p49 = scmp.eq.s32.totalorder %s27, 1
      %p50 = por %p48, %p49
      %p52 = scmp.ne.s32.totalorder %s35, %s51
      %p53 = scmp.eq.s32.totalorder %s27, 0
      %p54 = por %p52, %p53
      %s56 = sadd.s32 %s55, 1
      %p59 = scmp.eq.s32.totalorder %s21, 1
      %p60 = scmp.ne.s32.totalorder %s55, %s57
      %p61 = scmp.eq.s32.totalorder %s21, 0
      %p62 = por %p60, %p61
      %p63 = scmp.ne.s32.totalorder %s55, %s57
      %p64 = scmp.eq.s32.totalorder %s26, 1
      %p65 = por %p63, %p64
      %p66 = scmp.ne.s32.totalorder %s57, %s58
      %p67 = scmp.eq.s32.totalorder %s26, 0
      %p68 = por %p66, %p67
      %p69 = scmp.ne.s32.totalorder %s57, %s58
      %p70 = scmp.eq.s32.totalorder %s27, 1
      %p71 = por %p69, %p70
      %p73 = scmp.ne.s32.totalorder %s58, %s72
      %p74 = scmp.eq.s32.totalorder %s27, 0
      %p75 = por %p73, %p74
      %s77 = sadd.s32 %s76, 1
      %p80 = scmp.eq.s32.totalorder %s21, 1
      %p81 = scmp.ne.s32.totalorder %s76, %s78
      %p82 = scmp.eq.s32.totalorder %s21, 0
      %p83 = por %p81, %p82
      %p84 = scmp.ne.s32.totalorder %s76, %s78
      %p85 = scmp.eq.s32.totalorder %s26, 1
      %p86 = por %p84, %p85
      %p87 = scmp.ne.s32.totalorder %s78, %s79
      %p88 = scmp.eq.s32.totalorder %s26, 0
      %p89 = por %p87, %p88
      %p90 = scmp.ne.s32.totalorder %s78, %s79
      %p91 = scmp.eq.s32.totalorder %s27, 1
      %p92 = por %p90, %p91
      %p94 = scmp.ne.s32.totalorder %s79, %s93
      %p95 = scmp.eq.s32.totalorder %s27, 0
      %p96 = por %p94, %p95
      %s98 = sadd.s32 %s97, 1
      %p101 = scmp.eq.s32.totalorder %s21, 1
      %p102 = scmp.ne.s32.totalorder %s97, %s99
      %p103 = scmp.eq.s32.totalorder %s21, 0
      %p104 = por %p102, %p103
      %p105 = scmp.ne.s32.totalorder %s97, %s99
      %p106 = scmp.eq.s32.totalorder %s26, 1
      %p107 = por %p105, %p106
      %p108 = scmp.ne.s32.totalorder %s99, %s100
      %p109 = scmp.eq.s32.totalorder %s26, 0
      %p110 = por %p108, %p109
      %p111 = scmp.ne.s32.totalorder %s99, %s100
      %p112 = scmp.eq.s32.totalorder %s27, 1
      %p113 = por %p111, %p112
      %p115 = scmp.ne.s32.totalorder %s100, %s114
      %p116 = scmp.eq.s32.totalorder %s27, 0
      %p117 = por %p115, %p116
      %s119 = sadd.s32 %s118, 1
      %p122 = scmp.eq.s32.totalorder %s21, 1
      %p123 = scmp.ne.s32.totalorder %s118, %s120
      %p124 = scmp.eq.s32.totalorder %s21, 0
      %p125 = por %p123, %p124
      %p126 = scmp.ne.s32.totalorder %s118, %s120
      %p127 = scmp.eq.s32.totalorder %s26, 1
      %p128 = por %p126, %p127
      %p129 = scmp.ne.s32.totalorder %s120, %s121
      %p130 = scmp.eq.s32.totalorder %s26, 0
      %p131 = por %p129, %p130
      %p132 = scmp.ne.s32.totalorder %s120, %s121
      %p133 = scmp.eq.s32.totalorder %s27, 1
      %p134 = por %p132, %p133
      %p136 = scmp.ne.s32.totalorder %s121, %s135
      %p137 = scmp.eq.s32.totalorder %s27, 0
      %p138 = por %p136, %p137
      %s140 = sadd.s32 %s139, 1
      %p143 = scmp.eq.s32.totalorder %s21, 1
      %p144 = scmp.ne.s32.totalorder %s139, %s141
      %p145 = scmp.eq.s32.totalorder %s21, 0
      %p146 = por %p144, %p145
      %p147 = scmp.ne.s32.totalorder %s139, %s141
      %p148 = scmp.eq.s32.totalorder %s26, 1
      %p149 = por %p147, %p148
      %p150 = scmp.ne.s32.totalorder %s141, %s142
      %p151 = scmp.eq.s32.totalorder %s26, 0
      %p152 = por %p150, %p151
      %p153 = scmp.ne.s32.totalorder %s141, %s142
      %p154 = scmp.eq.s32.totalorder %s27, 1
      %p155 = por %p153, %p154
      %p157 = scmp.ne.s32.totalorder %s142, %s156
      %p158 = scmp.eq.s32.totalorder %s27, 0
      %p159 = por %p157, %p158
      %s161 = sadd.s32 %s160, 1
      %p164 = scmp.eq.s32.totalorder %s21, 1
      %p165 = scmp.ne.s32.totalorder %s160, %s162
      %p166 = scmp.eq.s32.totalorder %s21, 0
      %p167 = por %p165, %p166
      %p168 = scmp.ne.s32.totalorder %s160, %s162
      %p169 = scmp.eq.s32.totalorder %s26, 1
      %p170 = por %p168, %p169
      %p171 = scmp.ne.s32.totalorder %s162, %s163
      %p172 = scmp.eq.s32.totalorder %s26, 0
      %p173 = por %p171, %p172
      %p174 = scmp.ne.s32.totalorder %s162, %s163
      %p175 = scmp.eq.s32.totalorder %s27, 1
      %p176 = por %p174, %p175
      %p178 = scmp.ne.s32.totalorder %s163, %s177
      %p179 = scmp.eq.s32.totalorder %s27, 0
      %p180 = por %p178, %p179
      %s182 = sadd.s32 %s181, 1
      %p185 = scmp.eq.s32.totalorder %s21, 1
      %p186 = scmp.ne.s32.totalorder %s181, %s183
      %p187 = scmp.eq.s32.totalorder %s21, 0
      %p188 = por %p186, %p187
      %p189 = scmp.ne.s32.totalorder %s181, %s183
      %p190 = scmp.eq.s32.totalorder %s26, 1
      %p191 = por %p189, %p190
      %p192 = scmp.ne.s32.totalorder %s183, %s184
      %p193 = scmp.eq.s32.totalorder %s26, 0
      %p194 = por %p192, %p193
      %p195 = scmp.ne.s32.totalorder %s183, %s184
      %p196 = scmp.eq.s32.totalorder %s27, 1
      %p197 = por %p195, %p196
      %p199 = scmp.ne.s32.totalorder %s184, %s198
      %p200 = scmp.eq.s32.totalorder %s27, 0
      %p201 = por %p199, %p200
      %s203 = sadd.s32 %s202, 1
      %p206 = scmp.eq.s32.totalorder %s21, 1
      %p207 = scmp.ne.s32.totalorder %s202, %s204
      %p208 = scmp.eq.s32.totalorder %s21, 0
      %p209 = por %p207, %p208
      %p210 = scmp.ne.s32.totalorder %s202, %s204
      %p211 = scmp.eq.s32.totalorder %s26, 1
      %p212 = por %p210, %p211
      %p213 = scmp.ne.s32.totalorder %s204, %s205
      %p214 = scmp.eq.s32.totalorder %s26, 0
      %p215 = por %p213, %p214
      %p216 = scmp.ne.s32.totalorder %s204, %s205
      %p217 = scmp.eq.s32.totalorder %s27, 1
      %p218 = por %p216, %p217
      %p220 = scmp.ne.s32.totalorder %s205, %s219
      %p221 = scmp.eq.s32.totalorder %s27, 0
      %p222 = por %p220, %p221
      %s224 = sadd.s32 %s223, 1
      %p227 = scmp.eq.s32.totalorder %s21, 1
      %p228 = scmp.ne.s32.totalorder %s223, %s225
      %p229 = scmp.eq.s32.totalorder %s21, 0
      %p230 = por %p228, %p229
      %p231 = scmp.ne.s32.totalorder %s223, %s225
      %p232 = scmp.eq.s32.totalorder %s26, 1
      %p233 = por %p231, %p232
      %p234 = scmp.ne.s32.totalorder %s225, %s226
      %p235 = scmp.eq.s32.totalorder %s26, 0
      %p236 = por %p234, %p235
      %p237 = scmp.ne.s32.totalorder %s225, %s226
      %p238 = scmp.eq.s32.totalorder %s27, 1
      %p239 = por %p237, %p238
      %p241 = scmp.ne.s32.totalorder %s226, %s240
      %p242 = scmp.eq.s32.totalorder %s27, 0
      %p243 = por %p241, %p242
      %s245 = sadd.s32 %s244, 1
      %p248 = scmp.eq.s32.totalorder %s21, 1
      %p249 = scmp.ne.s32.totalorder %s244, %s246
      %p250 = scmp.eq.s32.totalorder %s21, 0
      %p251 = por %p249, %p250
      %p252 = scmp.ne.s32.totalorder %s244, %s246
      %p253 = scmp.eq.s32.totalorder %s26, 1
      %p254 = por %p252, %p253
      %p255 = scmp.ne.s32.totalorder %s246, %s247
      %p256 = scmp.eq.s32.totalorder %s26, 0
      %p257 = por %p255, %p256
      %p258 = scmp.ne.s32.totalorder %s246, %s247
      %p259 = scmp.eq.s32.totalorder %s27, 1
      %p260 = por %p258, %p259
      %p262 = scmp.ne.s32.totalorder %s247, %s261
      %p263 = scmp.eq.s32.totalorder %s27, 0
      %p264 = por %p262, %p263
      %s266 = sadd.s32 %s265, 1
      %p269 = scmp.eq.s32.totalorder %s21, 1
      %p270 = scmp.ne.s32.totalorder %s265, %s267
      %p271 = scmp.eq.s32.totalorder %s21, 0
      %p272 = por %p270, %p271
      %p273 = scmp.ne.s32.totalorder %s265, %s267
      %p274 = scmp.eq.s32.totalorder %s26, 1
      %p275 = por %p273, %p274
      %p276 = scmp.ne.s32.totalorder %s267, %s268
      %p277 = scmp.eq.s32.totalorder %s26, 0
      %p278 = por %p276, %p277
      %p279 = scmp.ne.s32.totalorder %s267, %s268
      %p280 = scmp.eq.s32.totalorder %s27, 1
      %p281 = por %p279, %p280
      %p283 = scmp.ne.s32.totalorder %s268, %s282
      %p284 = scmp.eq.s32.totalorder %s27, 0
      %p285 = por %p283, %p284
      %s286 = ssub.s32 %s21, %s28
      %p287 = scmp.eq.s32.totalorder %s286, 0
      %s289 = sadd.s32 %s288, 1
      %s290 = scalar_select %p287, %s288, %s289
      %p293 = pneg %p287
      %p294 = scmp.eq.s32.totalorder %s21, 1
      %p295 = por %p293, %p294
      %p296 = scmp.ne.s32.totalorder %s288, %s291
      %p297 = scmp.eq.s32.totalorder %s21, 0
      %p298 = por %p296, %p297
      %p299 = scmp.ne.s32.totalorder %s288, %s291
      %p300 = scmp.eq.s32.totalorder %s26, 1
      %p301 = por %p299, %p300
      %p302 = scmp.ne.s32.totalorder %s291, %s292
      %p303 = scmp.eq.s32.totalorder %s26, 0
      %p304 = por %p302, %p303
      %p305 = scmp.ne.s32.totalorder %s291, %s292
      %p306 = scmp.eq.s32.totalorder %s27, 1
      %p307 = por %p305, %p306
      %p309 = scmp.ne.s32.totalorder %s292, %s308
      %p310 = scmp.eq.s32.totalorder %s27, 0
      %p311 = por %p309, %p310
      %p312 = scmp.le.s32.totalorder 1, %s21
      %p313 = scmp.lt.s32.totalorder %s21, 3
      %p314 = pnand %p312, %p313
      %p315 = pneg %p314
      // Predicated region
      $region9: #{encoder_layer.1} parent=5 // pred_check
        _
      $region10: #{encoder_layer.1} parent=5 // pred_check_branch
        %317 = sbr.rel (%p314) target = $region12
      $region11: #{encoder_layer.1} parent=5 // pred_region
        %s318 = ssub.s32 %s21, 1
        // Predicated region
        $region13: #{encoder_layer.1} parent=11 // pred_check
          %p319 = pneg %p68
        $region14: #{encoder_layer.1} parent=11 // pred_check_branch
          %321 = sbr.rel (%p319) target = $region16
        $region15: #{encoder_layer.1} parent=11 // pred_region
          _
        $region16: #{encoder_layer.1} parent=11 // pred_fallthru
          _
        // Predicated region
        $region17: #{encoder_layer.1} parent=11 // pred_check
          %p322 = pneg %p89
        $region18: #{encoder_layer.1} parent=11 // pred_check_branch
          %324 = sbr.rel (%p322) target = $region20
        $region19: #{encoder_layer.1} parent=11 // pred_region
          _
        $region20: #{encoder_layer.1} parent=11 // pred_fallthru
          _
        // Predicated region
        $region21: #{encoder_layer.1} parent=11 // pred_check
          %p325 = pneg %p110
        $region22: #{encoder_layer.1} parent=11 // pred_check_branch
          %327 = sbr.rel (%p325) target = $region24
        $region23: #{encoder_layer.1} parent=11 // pred_region
          _
        $region24: #{encoder_layer.1} parent=11 // pred_fallthru
          _
        // Predicated region
        $region25: #{encoder_layer.1} parent=11 // pred_check
          %p328 = pneg %p131
        $region26: #{encoder_layer.1} parent=11 // pred_check_branch
          %330 = sbr.rel (%p328) target = $region28
        $region27: #{encoder_layer.1} parent=11 // pred_region
          _
        $region28: #{encoder_layer.1} parent=11 // pred_fallthru
          _
        // Predicated region
        $region29: #{encoder_layer.1} parent=11 // pred_check
          %p331 = pneg %p152
        $region30: #{encoder_layer.1} parent=11 // pred_check_branch
          %333 = sbr.rel (%p331) target = $region32
        $region31: #{encoder_layer.1} parent=11 // pred_region
          _
        $region32: #{encoder_layer.1} parent=11 // pred_fallthru
          _
        // Predicated region
        $region33: #{encoder_layer.1} parent=11 // pred_check
          %p334 = pneg %p173
        $region34: #{encoder_layer.1} parent=11 // pred_check_branch
          %336 = sbr.rel (%p334) target = $region36
        $region35: #{encoder_layer.1} parent=11 // pred_region
          _
        $region36: #{encoder_layer.1} parent=11 // pred_fallthru
          _
        // Predicated region
        $region37: #{encoder_layer.1} parent=11 // pred_check
          %p337 = pneg %p194
        $region38: #{encoder_layer.1} parent=11 // pred_check_branch
          %339 = sbr.rel (%p337) target = $region40
        $region39: #{encoder_layer.1} parent=11 // pred_region
          _
        $region40: #{encoder_layer.1} parent=11 // pred_fallthru
          _
        // Predicated region
        $region41: #{encoder_layer.1} parent=11 // pred_check
          %p340 = pneg %p215
        $region42: #{encoder_layer.1} parent=11 // pred_check_branch
          %342 = sbr.rel (%p340) target = $region44
        $region43: #{encoder_layer.1} parent=11 // pred_region
          _
        $region44: #{encoder_layer.1} parent=11 // pred_fallthru
          _
        // Predicated region
        $region45: #{encoder_layer.1} parent=11 // pred_check
          %p343 = pneg %p236
        $region46: #{encoder_layer.1} parent=11 // pred_check_branch
          %345 = sbr.rel (%p343) target = $region48
        $region47: #{encoder_layer.1} parent=11 // pred_region
          _
        $region48: #{encoder_layer.1} parent=11 // pred_fallthru
          _
        // Predicated region
        $region49: #{encoder_layer.1} parent=11 // pred_check
          %p346 = pneg %p257
        $region50: #{encoder_layer.1} parent=11 // pred_check_branch
          %348 = sbr.rel (%p346) target = $region52
        $region51: #{encoder_layer.1} parent=11 // pred_region
          _
        $region52: #{encoder_layer.1} parent=11 // pred_fallthru
          _
        // Predicated region
        $region53: #{encoder_layer.1} parent=11 // pred_check
          %p349 = pneg %p278
        $region54: #{encoder_layer.1} parent=11 // pred_check_branch
          %351 = sbr.rel (%p349) target = $region56
        $region55: #{encoder_layer.1} parent=11 // pred_region
          _
        $region56: #{encoder_layer.1} parent=11 // pred_fallthru
          _
      $region12: #{encoder_layer.1} parent=5 // pred_fallthru
        _
      %p352 = scmp.lt.s32.totalorder %s21, 2
      // Predicated region
      $region57: #{encoder_layer.1} parent=5 // pred_check
        %p353 = pneg %p352
      $region58: #{encoder_layer.1} parent=5 // pred_check_branch
        %355 = sbr.rel (%p353) target = $region60
      $region59: #{encoder_layer.1} parent=5 // pred_region
        // Predicated region
        $region61: #{encoder_layer.1} parent=59 // pred_check
          %p356 = pneg %p41
        $region62: #{encoder_layer.1} parent=59 // pred_check_branch
          %358 = sbr.rel (%p356) target = $region64
        $region63: #{encoder_layer.1} parent=59 // pred_region
          %p359 = scmp.lt.s32.totalorder %s21, 1
          %s360 = scalar_select %p359, %s21, 1
          %s361 = smul.addr %s360, 8
          %s362 = scalar_lea.vmem %s0, %s361
        $region64: #{encoder_layer.1} parent=59 // pred_fallthru
          _
      $region60: #{encoder_layer.1} parent=5 // pred_fallthru
        _
      %p363 = scmp.le.s32.totalorder 1, %s21
      %p364 = scmp.lt.s32.totalorder %s21, 3
      %p365 = pnand %p363, %p364
      %p366 = pneg %p365
      // Predicated region
      $region65: #{encoder_layer.1} parent=5 // pred_check
        _
      $region66: #{encoder_layer.1} parent=5 // pred_check_branch
        %368 = sbr.rel (%p365) target = $region68
      $region67: #{encoder_layer.1} parent=5 // pred_region
        %s369 = ssub.s32 %s21, 1
        %p370 = scmp.lt.s32.totalorder %s26, 1
        %s371 = scalar_select %p370, %s26, 1
        %s372 = smul.addr %s371, 8
        %s373 = scalar_lea.vmem %s0, %s372
        %p374 = pneg %p47
        %p375 = pneg %p44
        %p376 = pneg %p68
        %p377 = pneg %p65
        %p378 = pneg %p89
        %p379 = pneg %p86
        %p380 = pneg %p110
        %p381 = pneg %p107
        %p382 = pneg %p131
        %p383 = pneg %p128
        %p384 = pneg %p152
        %p385 = pneg %p149
        %p386 = pneg %p173
        %p387 = pneg %p170
        %p388 = pneg %p194
        %p389 = pneg %p191
        %p390 = pneg %p215
        %p391 = pneg %p212
        %p392 = pneg %p236
        %p393 = pneg %p233
        %p394 = pneg %p257
        %p395 = pneg %p254
        %p396 = pneg %p278
        %p397 = pneg %p275
        %p398 = pneg %p304
        %p399 = pneg %p301
        %s400 = sand.u32 %s291, 1
        %s401 = scalar_lea.sflag [#allocation3], %s400
        %s402 = sand.u32 %s291, 1
        %s403 = smul.addr %s402, 8
        %s404 = scalar_lea.vmem [#allocation2], %s403
        %p405 = scmp.lt.s32.totalorder %s26, 1
        %s406 = scalar_select %p405, %s26, 1
        %s407 = smul.addr %s406, 8
        %s408 = scalar_lea.vmem %s0, %s407
        %v409 = vld [vmem:[%s408] sm:$0xff]
        %v410 = vld [vmem:[%s1] sm:$0xff]
        %v411 = vld [vmem:[%s1 + $0x8] sm:$0xff]
        %v412 = vld [vmem:[%s1 + $0x10] sm:$0xff]
        %v413 = vld [vmem:[%s1 + $0x18] sm:$0xff]
        %vm414 = vcmask 261120
        %v416 = vsel %vm414, %v409, 0
        %418 = vmatprep.subr.mxu0 0.0
        %419 = vmatpush1.msra.mxu0 %v410
        %420 = vmatprep.subr.mxu0 0.0
        %421 = vmatpush1.msra.mxu0 %v411
        %422 = vmatprep.subr.mxu0 0.0
        %423 = vmatpush1.msra.mxu0 %v412
        %424 = vmatprep.subr.mxu0 0.0
        %425 = vmatpush1.msra.mxu0 %v413
        %426 = vmatprep.subr.mxu0 0.0
        %427 = vmatpush1.msra.mxu0 0.0
        %428 = vmatprep.subr.mxu0 0.0
        %429 = vmatpush1.msra.mxu0 0.0
        %430 = vmatprep.subr.mxu0 0.0
        %431 = vmatpush1.msra.mxu0 0.0
        %432 = vmatprep.subr.mxu0 0.0
        %433 = vmatpush1.msra.mxu0 0.0
        %434 = vmatprep.subr.mxu0 0.0
        %435 = vmatpush1.msra.mxu0 0.0
        %436 = vmatprep.subr.mxu0 0.0
        %437 = vmatpush1.msra.mxu0 0.0
        %438 = vmatprep.subr.mxu0 0.0
        %439 = vmatpush1.msra.mxu0 0.0
        %440 = vmatprep.subr.mxu0 0.0
        %441 = vmatpush1.msra.mxu0 0.0
        %442 = vmatprep.subr.mxu0 0.0
        %443 = vmatpush1.msra.mxu0 0.0
        %444 = vmatprep.subr.mxu0 0.0
        %445 = vmatpush1.msra.mxu0 0.0
        %446 = vmatprep.subr.mxu0 0.0
        %447 = vmatpush1.msra.mxu0 0.0
        %448 = vmatprep.subr.mxu0 0.0
        %449 = vmatpush1.msra.mxu0 0.0
        %450 = vmatprep.subr.mxu0 0.0
        %451 = vmatpush1.msra.mxu0 0.0
        %452 = vmatprep.subr.mxu0 0.0
        %453 = vmatpush1.msra.mxu0 0.0
        %454 = vmatprep.subr.mxu0 0.0
        %455 = vmatpush1.msra.mxu0 0.0
        %456 = vmatprep.subr.mxu0 0.0
        %457 = vmatpush1.msra.mxu0 0.0
        %458 = vmatprep.subr.mxu0 0.0
        %459 = vmatpush1.msra.mxu0 0.0
        %460 = vmatprep.subr.mxu0 0.0
        %461 = vmatpush1.msra.mxu0 0.0
        %462 = vmatprep.subr.mxu0 0.0
        %463 = vmatpush1.msra.mxu0 0.0
        %464 = vmatprep.subr.mxu0 0.0
        %465 = vmatpush1.msra.mxu0 0.0
        %466 = vmatprep.subr.mxu0 0.0
        %467 = vmatpush1.msra.mxu0 0.0
        %468 = vmatprep.subr.mxu0 0.0
        %469 = vmatpush1.msra.mxu0 0.0
        %470 = vmatprep.subr.mxu0 0.0
        %471 = vmatpush1.msra.mxu0 0.0
        %472 = vmatprep.subr.mxu0 0.0
        %473 = vmatpush1.msra.mxu0 0.0
        %474 = vmatprep.subr.mxu0 0.0
        %475 = vmatpush1.msra.mxu0 0.0
        %476 = vmatprep.subr.mxu0 0.0
        %477 = vmatpush1.msra.mxu0 0.0
        %478 = vmatprep.subr.mxu0 0.0
        %479 = vmatpush1.msra.mxu0 0.0
        %480 = vmatprep.subr.mxu0 0.0
        %481 = vmatpush1.msra.mxu0 0.0
        %482 = vmatprep.mubr.f32.mxu0 0.0
        %483 = vmatmul.mubr.f32.gmra.mrb[0].mxu0 %v416
        %v484 = vpop.f32.mrb[0].mxu0
        %v485 = vadd.f32 0.0, %v484
        %v486 = vpop.f32.mrb[0].mxu0
        %487 = vdwg.mxu0
        %v488 = vld [vmem:[%s3] sm:$0xff]
        %v489 = vld [vmem:[%s3 + $0x8] sm:$0xff]
        %v490 = vld [vmem:[%s3 + $0x10] sm:$0xff]
        %v491 = vld [vmem:[%s3 + $0x18] sm:$0xff]
        %v492 = vld [vmem:[%s4] sm:$0xff]
        %v493 = vld [vmem:[%s4 + $0x8] sm:$0xff]
        %v494 = vld [vmem:[%s4 + $0x10] sm:$0xff]
        %v495 = vld [vmem:[%s4 + $0x18] sm:$0xff]
        %497 = vrot.lane.b32.xlu0 %v485, 120
        %v498 = vpop.permute.xlu0 %497
        %500 = vrot.lane.b32.xlu0 %v485, 112
        %v501 = vpop.permute.xlu0 %500
        %503 = vrot.lane.b32.xlu0 %v485, 104
        %v504 = vpop.permute.xlu0 %503
        %v506 = vsub.f32 0.0, %v485
        %v507 = vsub.f32 0.0, %v498
        %v508 = vsub.f32 0.0, %v501
        %v509 = vsub.f32 0.0, %v504
        %514 = vrot.lane.b32.xlu0 %v506, 124
        %v515 = vpop.permute.xlu0 %514
        %516 = vrot.lane.b32.xlu0 %v507, 124
        %v517 = vpop.permute.xlu0 %516
        %518 = vrot.lane.b32.xlu0 %v508, 124
        %v519 = vpop.permute.xlu0 %518
        %520 = vrot.lane.b32.xlu0 %v509, 124
        %v521 = vpop.permute.xlu0 %520
        %526 = vrot.lane.b32.xlu0 %v485, 4
        %v527 = vpop.permute.xlu0 %526
        %528 = vrot.lane.b32.xlu0 %v498, 4
        %v529 = vpop.permute.xlu0 %528
        %530 = vrot.lane.b32.xlu0 %v501, 4
        %v531 = vpop.permute.xlu0 %530
        %532 = vrot.lane.b32.xlu0 %v504, 4
        %v533 = vpop.permute.xlu0 %532
        %vm538 = vcmask 31744
        %v539 = vsel %vm538, %v515, %v527
        %v540 = vsel %vm538, %v517, %v529
        %v541 = vsel %vm538, %v519, %v531
        %v542 = vsel %vm538, %v521, %v533
        %v543 = vmul.f32 %v485, %v488
        %v544 = vmul.f32 %v498, %v489
        %v545 = vmul.f32 %v501, %v490
        %v546 = vmul.f32 %v504, %v491
        %v547 = vmul.f32 %v539, %v492
        %v548 = vmul.f32 %v540, %v493
        %v549 = vmul.f32 %v541, %v494
        %v550 = vmul.f32 %v542, %v495
        %v551 = vadd.f32 %v543, %v547
        %v552 = vadd.f32 %v544, %v548
        %v553 = vadd.f32 %v545, %v549
        %v554 = vadd.f32 %v546, %v550
        %555 = vrot.lane.b32.xlu0 %v506, 92
        %v556 = vpop.permute.xlu0 %555
        %558 = vrot.lane.b32.xlu0 %v485, 100
        %v559 = vpop.permute.xlu0 %558
        %v561 = vsel %vm538, %v556, %v559
        %563 = vrot.lane.b32.xlu0 %v488, 32
        %v564 = vpop.permute.xlu0 %563
        %v566 = vmul.f32 %v485, %v564
        %v567 = vmul.f32 %v561, %v492
        %569 = vrot.lane.b32.xlu0 %v567, 32
        %v570 = vpop.permute.xlu0 %569
        %v572 = vadd.f32 %v566, %v570
        %574 = vrot.lane.b32.xlu0 %v572, 96
        %v575 = vpop.permute.xlu0 %574
        %vm576 = vcmask 64512
        %v578 = vsel %vm576, %v551, 0
        %v581 = vsel %vm576, %v552, 0
        %v584 = vsel %vm576, %v553, 0
        %v587 = vsel %vm576, %v554, 0
        %v589 = vsel %vm576, %v575, 0
        %591 = vmatprep.subr.mxu0 0.0
        %592 = vmatpush1.xpose.msra.mxu0 %v589
        %593 = vmatprep.subr.mxu0 0.0
        %594 = vmatpush1.xpose.msra.mxu0 0.0
        %595 = vmatprep.subr.mxu0 0.0
        %596 = vmatpush1.xpose.msra.mxu0 0.0
        %597 = vmatprep.subr.mxu0 0.0
        %598 = vmatpush1.xpose.msra.mxu0 0.0
        %599 = vmatprep.subr.mxu0 0.0
        %600 = vmatpush1.xpose.msra.mxu0 0.0
        %601 = vmatprep.subr.mxu0 0.0
        %602 = vmatpush1.xpose.msra.mxu0 0.0
        %603 = vmatprep.subr.mxu0 0.0
        %604 = vmatpush1.xpose.msra.mxu0 0.0
        %605 = vmatprep.subr.mxu0 0.0
        %606 = vmatpush1.xpose.msra.mxu0 0.0
        %607 = vmatprep.subr.mxu0 0.0
        %608 = vmatpush1.xpose.msra.mxu0 0.0
        %609 = vmatprep.subr.mxu0 0.0
        %610 = vmatpush1.xpose.msra.mxu0 0.0
        %611 = vmatprep.subr.mxu0 0.0
        %612 = vmatpush1.xpose.msra.mxu0 0.0
        %613 = vmatprep.subr.mxu0 0.0
        %614 = vmatpush1.xpose.msra.mxu0 0.0
        %615 = vmatprep.subr.mxu0 0.0
        %616 = vmatpush1.xpose.msra.mxu0 0.0
        %617 = vmatprep.subr.mxu0 0.0
        %618 = vmatpush1.xpose.msra.mxu0 0.0
        %619 = vmatprep.subr.mxu0 0.0
        %620 = vmatpush1.xpose.msra.mxu0 0.0
        %621 = vmatprep.subr.mxu0 0.0
        %622 = vmatpush1.xpose.msra.mxu0 0.0
        %623 = vmatprep.subr.mxu0 0.0
        %624 = vmatpush1.xpose.msra.mxu0 0.0
        %625 = vmatprep.subr.mxu0 0.0
        %626 = vmatpush1.xpose.msra.mxu0 0.0
        %627 = vmatprep.subr.mxu0 0.0
        %628 = vmatpush1.xpose.msra.mxu0 0.0
        %629 = vmatprep.subr.mxu0 0.0
        %630 = vmatpush1.xpose.msra.mxu0 0.0
        %631 = vmatprep.subr.mxu0 0.0
        %632 = vmatpush1.xpose.msra.mxu0 0.0
        %633 = vmatprep.subr.mxu0 0.0
        %634 = vmatpush1.xpose.msra.mxu0 0.0
        %635 = vmatprep.subr.mxu0 0.0
        %636 = vmatpush1.xpose.msra.mxu0 0.0
        %637 = vmatprep.subr.mxu0 0.0
        %638 = vmatpush1.xpose.msra.mxu0 0.0
        %639 = vmatprep.subr.mxu0 0.0
        %640 = vmatpush1.xpose.msra.mxu0 0.0
        %641 = vmatprep.subr.mxu0 0.0
        %642 = vmatpush1.xpose.msra.mxu0 0.0
        %643 = vmatprep.subr.mxu0 0.0
        %644 = vmatpush1.xpose.msra.mxu0 0.0
        %645 = vmatprep.subr.mxu0 0.0
        %646 = vmatpush1.xpose.msra.mxu0 0.0
        %647 = vmatprep.subr.mxu0 0.0
        %648 = vmatpush1.xpose.msra.mxu0 0.0
        %649 = vmatprep.subr.mxu0 0.0
        %650 = vmatpush1.xpose.msra.mxu0 0.0
        %651 = vmatprep.subr.mxu0 0.0
        %652 = vmatpush1.xpose.msra.mxu0 0.0
        %653 = vmatprep.subr.mxu0 0.0
        %654 = vmatpush1.xpose.msra.mxu0 0.0
        %655 = vmatprep.mubr.f32.mxu0 0.0
        %656 = vmatmul.mubr.f32.gmra.mrb[0].mxu0 %v578
        %v657 = vpop.f32.mrb[0].mxu0
        %v658 = vadd.f32 0.0, %v657
        %v659 = vpop.f32.mrb[0].mxu0
        %660 = vmatprep.mubr.f32.mxu0 0.0
        %661 = vmatmul.mubr.f32.gmra.mrb[0].mxu0 %v581
        %v662 = vpop.f32.mrb[0].mxu0
        %v663 = vadd.f32 0.0, %v662
        %v664 = vpop.f32.mrb[0].mxu0
        %665 = vmatprep.mubr.f32.mxu0 0.0
        %666 = vmatmul.mubr.f32.gmra.mrb[0].mxu0 %v584
        %v667 = vpop.f32.mrb[0].mxu0
        %v668 = vadd.f32 0.0, %v667
        %v669 = vpop.f32.mrb[0].mxu0
        %670 = vmatprep.mubr.f32.mxu0 0.0
        %671 = vmatmul.mubr.f32.gmra.mrb[0].mxu0 %v587
        %v672 = vpop.f32.mrb[0].mxu0
        %v673 = vadd.f32 0.0, %v672
        %v674 = vpop.f32.mrb[0].mxu0
        %675 = vdwg.mxu0
        %v676 = vmul.f32 %v658, 0.35355338
        %v677 = vmul.f32 %v663, 0.35355338
        %v678 = vmul.f32 %v668, 0.35355338
        %v679 = vmul.f32 %v673, 0.35355338
        %v680 = vsel %vm576, %v676, -inf
        %681 = vmax.xlane.f32.xlu0 %v680
        %v682 = vpop.xlane.xlu0 %681
        %v683 = vsel %vm576, %v677, -inf
        %684 = vmax.xlane.f32.xlu0 %v683
        %v685 = vpop.xlane.xlu0 %684
        %v686 = vsel %vm576, %v678, -inf
        %687 = vmax.xlane.f32.xlu0 %v686
        %v688 = vpop.xlane.xlu0 %687
        %v689 = vsel %vm576, %v679, -inf
        %690 = vmax.xlane.f32.xlu0 %v689
        %v691 = vpop.xlane.xlu0 %690
        %v692 = vsub.f32 %v676, %v682
        %v693 = vsub.f32 %v677, %v685
        %v694 = vsub.f32 %v678, %v688
        %v695 = vsub.f32 %v679, %v691
        %v696 = vmul.f32 %v692, 1.442695
        %v697 = vpow.pop %v696
        %v698 = vmul.f32 %v693, 1.442695
        %v699 = vpow.pop %v698
        %v700 = vmul.f32 %v694, 1.442695
        %v701 = vpow.pop %v700
        %v702 = vmul.f32 %v695, 1.442695
        %v703 = vpow.pop %v702
        %v704 = vsel %vm576, %v697, 0.0
        %705 = vadd.xlane.f32.xlu0 %v704
        %v706 = vpop.xlane.xlu0 %705
        %v707 = vsel %vm576, %v699, 0.0
        %708 = vadd.xlane.f32.xlu0 %v707
        %v709 = vpop.xlane.xlu0 %708
        %v710 = vsel %vm576, %v701, 0.0
        %711 = vadd.xlane.f32.xlu0 %v710
        %v712 = vpop.xlane.xlu0 %711
        %v713 = vsel %vm576, %v703, 0.0
        %714 = vadd.xlane.f32.xlu0 %v713
        %v715 = vpop.xlane.xlu0 %714
        %v716 = vrcp.pop %v706
        %v717 = vmul.f32 %v697, %v716
        %v718 = vrcp.pop %v709
        %v719 = vmul.f32 %v699, %v718
        %v720 = vrcp.pop %v712
        %v721 = vmul.f32 %v701, %v720
        %v722 = vrcp.pop %v715
        %v723 = vmul.f32 %v703, %v722
        %724 = vrot.lane.b32.xlu0 %v485, 88
        %v725 = vpop.permute.xlu0 %724
        %v728 = vsel %vm576, %v717, 0
        %v731 = vsel %vm576, %v719, 0
        %v734 = vsel %vm576, %v721, 0
        %v737 = vsel %vm576, %v723, 0
        %739 = vmatprep.subr.mxu0 0.0
        %740 = vmatpush1.msra.mxu0 %v725
        %741 = vmatprep.subr.mxu0 0.0
        %742 = vmatpush1.msra.mxu0 0.0
        %743 = vmatprep.subr.mxu0 0.0
        %744 = vmatpush1.msra.mxu0 0.0
        %745 = vmatprep.subr.mxu0 0.0
        %746 = vmatpush1.msra.mxu0 0.0
        %747 = vmatprep.subr.mxu0 0.0
        %748 = vmatpush1.msra.mxu0 0.0
        %749 = vmatprep.subr.mxu0 0.0
        %750 = vmatpush1.msra.mxu0 0.0
        %751 = vmatprep.subr.mxu0 0.0
        %752 = vmatpush1.msra.mxu0 0.0
        %753 = vmatprep.subr.mxu0 0.0
        %754 = vmatpush1.msra.mxu0 0.0
        %755 = vmatprep.subr.mxu0 0.0
        %756 = vmatpush1.msra.mxu0 0.0
        %757 = vmatprep.subr.mxu0 0.0
        %758 = vmatpush1.msra.mxu0 0.0
        %759 = vmatprep.subr.mxu0 0.0
        %760 = vmatpush1.msra.mxu0 0.0
        %761 = vmatprep.subr.mxu0 0.0
        %762 = vmatpush1.msra.mxu0 0.0
        %763 = vmatprep.subr.mxu0 0.0
        %764 = vmatpush1.msra.mxu0 0.0
        %765 = vmatprep.subr.mxu0 0.0
        %766 = vmatpush1.msra.mxu0 0.0
        %767 = vmatprep.subr.mxu0 0.0
        %768 = vmatpush1.msra.mxu0 0.0
        %769 = vmatprep.subr.mxu0 0.0
        %770 = vmatpush1.msra.mxu0 0.0
        %771 = vmatprep.subr.mxu0 0.0
        %772 = vmatpush1.msra.mxu0 0.0
        %773 = vmatprep.subr.mxu0 0.0
        %774 = vmatpush1.msra.mxu0 0.0
        %775 = vmatprep.subr.mxu0 0.0
        %776 = vmatpush1.msra.mxu0 0.0
        %777 = vmatprep.subr.mxu0 0.0
        %778 = vmatpush1.msra.mxu0 0.0
        %779 = vmatprep.subr.mxu0 0.0
        %780 = vmatpush1.msra.mxu0 0.0
        %781 = vmatprep.subr.mxu0 0.0
        %782 = vmatpush1.msra.mxu0 0.0
        %783 = vmatprep.subr.mxu0 0.0
        %784 = vmatpush1.msra.mxu0 0.0
        %785 = vmatprep.subr.mxu0 0.0
        %786 = vmatpush1.msra.mxu0 0.0
        %787 = vmatprep.subr.mxu0 0.0
        %788 = vmatpush1.msra.mxu0 0.0
        %789 = vmatprep.subr.mxu0 0.0
        %790 = vmatpush1.msra.mxu0 0.0
        %791 = vmatprep.subr.mxu0 0.0
        %792 = vmatpush1.msra.mxu0 0.0
        %793 = vmatprep.subr.mxu0 0.0
        %794 = vmatpush1.msra.mxu0 0.0
        %795 = vmatprep.subr.mxu0 0.0
        %796 = vmatpush1.msra.mxu0 0.0
        %797 = vmatprep.subr.mxu0 0.0
        %798 = vmatpush1.msra.mxu0 0.0
        %799 = vmatprep.subr.mxu0 0.0
        %800 = vmatpush1.msra.mxu0 0.0
        %801 = vmatprep.subr.mxu0 0.0
        %802 = vmatpush1.msra.mxu0 0.0
        %803 = vmatprep.mubr.f32.mxu0 0.0
        %804 = vmatmul.mubr.f32.gmra.mrb[0].mxu0 %v728
        %v805 = vpop.f32.mrb[0].mxu0
        %v806 = vadd.f32 0.0, %v805
        %v807 = vpop.f32.mrb[0].mxu0
        %808 = vmatprep.mubr.f32.mxu0 0.0
        %809 = vmatmul.mubr.f32.gmra.mrb[0].mxu0 %v731
        %v810 = vpop.f32.mrb[0].mxu0
        %v811 = vadd.f32 0.0, %v810
        %v812 = vpop.f32.mrb[0].mxu0
        %813 = vmatprep.mubr.f32.mxu0 0.0
        %814 = vmatmul.mubr.f32.gmra.mrb[0].mxu0 %v734
        %v815 = vpop.f32.mrb[0].mxu0
        %v816 = vadd.f32 0.0, %v815
        %v817 = vpop.f32.mrb[0].mxu0
        %818 = vmatprep.mubr.f32.mxu0 0.0
        %819 = vmatmul.mubr.f32.gmra.mrb[0].mxu0 %v737
        %v820 = vpop.f32.mrb[0].mxu0
        %v821 = vadd.f32 0.0, %v820
        %v822 = vpop.f32.mrb[0].mxu0
        %823 = vdwg.mxu0
        %v824 = vld [vmem:[%s2] sm:$0xff]
        %v825 = vld [vmem:[%s2 + $0x8] sm:$0xff]
        %v827 = vsel %vm576, %v811, 0
        %829 = vmatprep.subr.mxu0 0.0
        %830 = vmatpush1.msra.mxu0 %v825
        %831 = vmatprep.subr.mxu0 0.0
        %832 = vmatpush1.msra.mxu0 0.0
        %833 = vmatprep.subr.mxu0 0.0
        %834 = vmatpush1.msra.mxu0 0.0
        %835 = vmatprep.subr.mxu0 0.0
        %836 = vmatpush1.msra.mxu0 0.0
        %837 = vmatprep.subr.mxu0 0.0
        %838 = vmatpush1.msra.mxu0 0.0
        %839 = vmatprep.subr.mxu0 0.0
        %840 = vmatpush1.msra.mxu0 0.0
        %841 = vmatprep.subr.mxu0 0.0
        %842 = vmatpush1.msra.mxu0 0.0
        %843 = vmatprep.subr.mxu0 0.0
        %844 = vmatpush1.msra.mxu0 0.0
        %845 = vmatprep.subr.mxu0 0.0
        %846 = vmatpush1.msra.mxu0 0.0
        %847 = vmatprep.subr.mxu0 0.0
        %848 = vmatpush1.msra.mxu0 0.0
        %849 = vmatprep.subr.mxu0 0.0
        %850 = vmatpush1.msra.mxu0 0.0
        %851 = vmatprep.subr.mxu0 0.0
        %852 = vmatpush1.msra.mxu0 0.0
        %853 = vmatprep.subr.mxu0 0.0
        %854 = vmatpush1.msra.mxu0 0.0
        %855 = vmatprep.subr.mxu0 0.0
        %856 = vmatpush1.msra.mxu0 0.0
        %857 = vmatprep.subr.mxu0 0.0
        %858 = vmatpush1.msra.mxu0 0.0
        %859 = vmatprep.subr.mxu0 0.0
        %860 = vmatpush1.msra.mxu0 0.0
        %861 = vmatprep.subr.mxu0 0.0
        %862 = vmatpush1.msra.mxu0 0.0
        %863 = vmatprep.subr.mxu0 0.0
        %864 = vmatpush1.msra.mxu0 0.0
        %865 = vmatprep.subr.mxu0 0.0
        %866 = vmatpush1.msra.mxu0 0.0
        %867 = vmatprep.subr.mxu0 0.0
        %868 = vmatpush1.msra.mxu0 0.0
        %869 = vmatprep.subr.mxu0 0.0
        %870 = vmatpush1.msra.mxu0 0.0
        %871 = vmatprep.subr.mxu0 0.0
        %872 = vmatpush1.msra.mxu0 0.0
        %873 = vmatprep.subr.mxu0 0.0
        %874 = vmatpush1.msra.mxu0 0.0
        %875 = vmatprep.subr.mxu0 0.0
        %876 = vmatpush1.msra.mxu0 0.0
        %877 = vmatprep.subr.mxu0 0.0
        %878 = vmatpush1.msra.mxu0 0.0
        %879 = vmatprep.subr.mxu0 0.0
        %880 = vmatpush1.msra.mxu0 0.0
        %881 = vmatprep.subr.mxu0 0.0
        %882 = vmatpush1.msra.mxu0 0.0
        %883 = vmatprep.subr.mxu0 0.0
        %884 = vmatpush1.msra.mxu0 0.0
        %885 = vmatprep.subr.mxu0 0.0
        %886 = vmatpush1.msra.mxu0 0.0
        %887 = vmatprep.subr.mxu0 0.0
        %888 = vmatpush1.msra.mxu0 0.0
        %889 = vmatprep.subr.mxu0 0.0
        %890 = vmatpush1.msra.mxu0 0.0
        %891 = vmatprep.subr.mxu0 0.0
        %892 = vmatpush1.msra.mxu0 0.0
        %893 = vmatprep.mubr.f32.mxu0 0.0
        %894 = vmatmul.mubr.f32.gmra.mrb[0].mxu0 %v827
        %v895 = vpop.f32.mrb[0].mxu0
        %v896 = vadd.f32 0.0, %v895
        %v897 = vpop.f32.mrb[0].mxu0
        %898 = vdwg.mxu0
        %v900 = vsel %vm576, %v806, 0
        %902 = vmatprep.subr.mxu0 0.0
        %903 = vmatpush1.msra.mxu0 %v824
        %904 = vmatprep.subr.mxu0 0.0
        %905 = vmatpush1.msra.mxu0 0.0
        %906 = vmatprep.subr.mxu0 0.0
        %907 = vmatpush1.msra.mxu0 0.0
        %908 = vmatprep.subr.mxu0 0.0
        %909 = vmatpush1.msra.mxu0 0.0
        %910 = vmatprep.subr.mxu0 0.0
        %911 = vmatpush1.msra.mxu0 0.0
        %912 = vmatprep.subr.mxu0 0.0
        %913 = vmatpush1.msra.mxu0 0.0
        %914 = vmatprep.subr.mxu0 0.0
        %915 = vmatpush1.msra.mxu0 0.0
        %916 = vmatprep.subr.mxu0 0.0
        %917 = vmatpush1.msra.mxu0 0.0
        %918 = vmatprep.subr.mxu0 0.0
        %919 = vmatpush1.msra.mxu0 0.0
        %920 = vmatprep.subr.mxu0 0.0
        %921 = vmatpush1.msra.mxu0 0.0
        %922 = vmatprep.subr.mxu0 0.0
        %923 = vmatpush1.msra.mxu0 0.0
        %924 = vmatprep.subr.mxu0 0.0
        %925 = vmatpush1.msra.mxu0 0.0
        %926 = vmatprep.subr.mxu0 0.0
        %927 = vmatpush1.msra.mxu0 0.0
        %928 = vmatprep.subr.mxu0 0.0
        %929 = vmatpush1.msra.mxu0 0.0
        %930 = vmatprep.subr.mxu0 0.0
        %931 = vmatpush1.msra.mxu0 0.0
        %932 = vmatprep.subr.mxu0 0.0
        %933 = vmatpush1.msra.mxu0 0.0
        %934 = vmatprep.subr.mxu0 0.0
        %935 = vmatpush1.msra.mxu0 0.0
        %936 = vmatprep.subr.mxu0 0.0
        %937 = vmatpush1.msra.mxu0 0.0
        %938 = vmatprep.subr.mxu0 0.0
        %939 = vmatpush1.msra.mxu0 0.0
        %940 = vmatprep.subr.mxu0 0.0
        %941 = vmatpush1.msra.mxu0 0.0
        %942 = vmatprep.subr.mxu0 0.0
        %943 = vmatpush1.msra.mxu0 0.0
        %944 = vmatprep.subr.mxu0 0.0
        %945 = vmatpush1.msra.mxu0 0.0
        %946 = vmatprep.subr.mxu0 0.0
        %947 = vmatpush1.msra.mxu0 0.0
        %948 = vmatprep.subr.mxu0 0.0
        %949 = vmatpush1.msra.mxu0 0.0
        %950 = vmatprep.subr.mxu0 0.0
        %951 = vmatpush1.msra.mxu0 0.0
        %952 = vmatprep.subr.mxu0 0.0
        %953 = vmatpush1.msra.mxu0 0.0
        %954 = vmatprep.subr.mxu0 0.0
        %955 = vmatpush1.msra.mxu0 0.0
        %956 = vmatprep.subr.mxu0 0.0
        %957 = vmatpush1.msra.mxu0 0.0
        %958 = vmatprep.subr.mxu0 0.0
        %959 = vmatpush1.msra.mxu0 0.0
        %960 = vmatprep.subr.mxu0 0.0
        %961 = vmatpush1.msra.mxu0 0.0
        %962 = vmatprep.subr.mxu0 0.0
        %963 = vmatpush1.msra.mxu0 0.0
        %964 = vmatprep.subr.mxu0 0.0
        %965 = vmatpush1.msra.mxu0 0.0
        %966 = vmatprep.mubr.f32.mxu0 0.0
        %967 = vmatmul.mubr.f32.gmra.mrb[0].mxu0 %v900
        %v968 = vpop.f32.mrb[0].mxu0
        %v969 = vadd.f32 %v896, %v968
        %v970 = vpop.f32.mrb[0].mxu0
        %971 = vdwg.mxu0
        %v972 = vld [vmem:[%s2 + $0x10] sm:$0xff]
        %v974 = vsel %vm576, %v816, 0
        %976 = vmatprep.subr.mxu0 0.0
        %977 = vmatpush1.msra.mxu0 %v972
        %978 = vmatprep.subr.mxu0 0.0
        %979 = vmatpush1.msra.mxu0 0.0
        %980 = vmatprep.subr.mxu0 0.0
        %981 = vmatpush1.msra.mxu0 0.0
        %982 = vmatprep.subr.mxu0 0.0
        %983 = vmatpush1.msra.mxu0 0.0
        %984 = vmatprep.subr.mxu0 0.0
        %985 = vmatpush1.msra.mxu0 0.0
        %986 = vmatprep.subr.mxu0 0.0
        %987 = vmatpush1.msra.mxu0 0.0
        %988 = vmatprep.subr.mxu0 0.0
        %989 = vmatpush1.msra.mxu0 0.0
        %990 = vmatprep.subr.mxu0 0.0
        %991 = vmatpush1.msra.mxu0 0.0
        %992 = vmatprep.subr.mxu0 0.0
        %993 = vmatpush1.msra.mxu0 0.0
        %994 = vmatprep.subr.mxu0 0.0
        %995 = vmatpush1.msra.mxu0 0.0
        %996 = vmatprep.subr.mxu0 0.0
        %997 = vmatpush1.msra.mxu0 0.0
        %998 = vmatprep.subr.mxu0 0.0
        %999 = vmatpush1.msra.mxu0 0.0
        %1000 = vmatprep.subr.mxu0 0.0
        %1001 = vmatpush1.msra.mxu0 0.0
        %1002 = vmatprep.subr.mxu0 0.0
        %1003 = vmatpush1.msra.mxu0 0.0
        %1004 = vmatprep.subr.mxu0 0.0
        %1005 = vmatpush1.msra.mxu0 0.0
        %1006 = vmatprep.subr.mxu0 0.0
        %1007 = vmatpush1.msra.mxu0 0.0
        %1008 = vmatprep.subr.mxu0 0.0
        %1009 = vmatpush1.msra.mxu0 0.0
        %1010 = vmatprep.subr.mxu0 0.0
        %1011 = vmatpush1.msra.mxu0 0.0
        %1012 = vmatprep.subr.mxu0 0.0
        %1013 = vmatpush1.msra.mxu0 0.0
        %1014 = vmatprep.subr.mxu0 0.0
        %1015 = vmatpush1.msra.mxu0 0.0
        %1016 = vmatprep.subr.mxu0 0.0
        %1017 = vmatpush1.msra.mxu0 0.0
        %1018 = vmatprep.subr.mxu0 0.0
        %1019 = vmatpush1.msra.mxu0 0.0
        %1020 = vmatprep.subr.mxu0 0.0
        %1021 = vmatpush1.msra.mxu0 0.0
        %1022 = vmatprep.subr.mxu0 0.0
        %1023 = vmatpush1.msra.mxu0 0.0
        %1024 = vmatprep.subr.mxu0 0.0
        %1025 = vmatpush1.msra.mxu0 0.0
        %1026 = vmatprep.subr.mxu0 0.0
        %1027 = vmatpush1.msra.mxu0 0.0
        %1028 = vmatprep.subr.mxu0 0.0
        %1029 = vmatpush1.msra.mxu0 0.0
        %1030 = vmatprep.subr.mxu0 0.0
        %1031 = vmatpush1.msra.mxu0 0.0
        %1032 = vmatprep.subr.mxu0 0.0
        %1033 = vmatpush1.msra.mxu0 0.0
        %1034 = vmatprep.subr.mxu0 0.0
        %1035 = vmatpush1.msra.mxu0 0.0
        %1036 = vmatprep.subr.mxu0 0.0
        %1037 = vmatpush1.msra.mxu0 0.0
        %1038 = vmatprep.subr.mxu0 0.0
        %1039 = vmatpush1.msra.mxu0 0.0
        %1040 = vmatprep.mubr.f32.mxu0 0.0
        %1041 = vmatmul.mubr.f32.gmra.mrb[0].mxu0 %v974
        %v1042 = vpop.f32.mrb[0].mxu0
        %v1043 = vadd.f32 0.0, %v1042
        %v1044 = vpop.f32.mrb[0].mxu0
        %1045 = vdwg.mxu0
        %v1046 = vadd.f32 %v969, %v1043
        %v1047 = vld [vmem:[%s2 + $0x18] sm:$0xff]
        %v1049 = vsel %vm576, %v821, 0
        %1051 = vmatprep.subr.mxu0 0.0
        %1052 = vmatpush1.msra.mxu0 %v1047
        %1053 = vmatprep.subr.mxu0 0.0
        %1054 = vmatpush1.msra.mxu0 0.0
        %1055 = vmatprep.subr.mxu0 0.0
        %1056 = vmatpush1.msra.mxu0 0.0
        %1057 = vmatprep.subr.mxu0 0.0
        %1058 = vmatpush1.msra.mxu0 0.0
        %1059 = vmatprep.subr.mxu0 0.0
        %1060 = vmatpush1.msra.mxu0 0.0
        %1061 = vmatprep.subr.mxu0 0.0
        %1062 = vmatpush1.msra.mxu0 0.0
        %1063 = vmatprep.subr.mxu0 0.0
        %1064 = vmatpush1.msra.mxu0 0.0
        %1065 = vmatprep.subr.mxu0 0.0
        %1066 = vmatpush1.msra.mxu0 0.0
        %1067 = vmatprep.subr.mxu0 0.0
        %1068 = vmatpush1.msra.mxu0 0.0
        %1069 = vmatprep.subr.mxu0 0.0
        %1070 = vmatpush1.msra.mxu0 0.0
        %1071 = vmatprep.subr.mxu0 0.0
        %1072 = vmatpush1.msra.mxu0 0.0
        %1073 = vmatprep.subr.mxu0 0.0
        %1074 = vmatpush1.msra.mxu0 0.0
        %1075 = vmatprep.subr.mxu0 0.0
        %1076 = vmatpush1.msra.mxu0 0.0
        %1077 = vmatprep.subr.mxu0 0.0
        %1078 = vmatpush1.msra.mxu0 0.0
        %1079 = vmatprep.subr.mxu0 0.0
        %1080 = vmatpush1.msra.mxu0 0.0
        %1081 = vmatprep.subr.mxu0 0.0
        %1082 = vmatpush1.msra.mxu0 0.0
        %1083 = vmatprep.subr.mxu0 0.0
        %1084 = vmatpush1.msra.mxu0 0.0
        %1085 = vmatprep.subr.mxu0 0.0
        %1086 = vmatpush1.msra.mxu0 0.0
        %1087 = vmatprep.subr.mxu0 0.0
        %1088 = vmatpush1.msra.mxu0 0.0
        %1089 = vmatprep.subr.mxu0 0.0
        %1090 = vmatpush1.msra.mxu0 0.0
        %1091 = vmatprep.subr.mxu0 0.0
        %1092 = vmatpush1.msra.mxu0 0.0
        %1093 = vmatprep.subr.mxu0 0.0
        %1094 = vmatpush1.msra.mxu0 0.0
        %1095 = vmatprep.subr.mxu0 0.0
        %1096 = vmatpush1.msra.mxu0 0.0
        %1097 = vmatprep.subr.mxu0 0.0
        %1098 = vmatpush1.msra.mxu0 0.0
        %1099 = vmatprep.subr.mxu0 0.0
        %1100 = vmatpush1.msra.mxu0 0.0
        %1101 = vmatprep.subr.mxu0 0.0
        %1102 = vmatpush1.msra.mxu0 0.0
        %1103 = vmatprep.subr.mxu0 0.0
        %1104 = vmatpush1.msra.mxu0 0.0
        %1105 = vmatprep.subr.mxu0 0.0
        %1106 = vmatpush1.msra.mxu0 0.0
        %1107 = vmatprep.subr.mxu0 0.0
        %1108 = vmatpush1.msra.mxu0 0.0
        %1109 = vmatprep.subr.mxu0 0.0
        %1110 = vmatpush1.msra.mxu0 0.0
        %1111 = vmatprep.subr.mxu0 0.0
        %1112 = vmatpush1.msra.mxu0 0.0
        %1113 = vmatprep.subr.mxu0 0.0
        %1114 = vmatpush1.msra.mxu0 0.0
        %1115 = vmatprep.mubr.f32.mxu0 0.0
        %1116 = vmatmul.mubr.f32.gmra.mrb[0].mxu0 %v1049
        %v1117 = vpop.f32.mrb[0].mxu0
        %v1118 = vadd.f32 0.0, %v1117
        %v1119 = vpop.f32.mrb[0].mxu0
        %1120 = vdwg.mxu0
        %v1121 = vadd.f32 %v1046, %v1118
        %v1122 = vadd.f32 %v1121, %v409
        %v1123 = vmul.f32 %v1122, %v1122
        %v1124 = vsel %vm414, %v1123, 0.0
        %1125 = vadd.xlane.f32.xlu0 %v1124
        %v1126 = vpop.xlane.xlu0 %1125
        %v1127 = vrcp.pop 32.0
        %v1128 = vmul.f32 %v1126, %v1127
        %v1129 = vadd.f32 %v1128, 1e-08
        %v1130 = vrsqrt.pop %v1129
        %v1131 = vmul.f32 %v1122, %v1130
        %v1132 = vld [vmem:[%s5] sm:$0x1]
        %v1134 = vlaneseq
        %v1135 = vshrl.u32 %v1134, 7
        %v1136 = vsub.s32 0, %v1135
        %v1137 = vrot.slane %v1132, %v1136
        %v1139 = vmul.f32 %v1131, %v1137
        %v1140 = vld [vmem:[%s6] sm:$0xff]
        %v1141 = vld [vmem:[%s6 + $0x8] sm:$0xff]
        %v1142 = vld [vmem:[%s6 + $0x10] sm:$0xff]
        %v1143 = vld [vmem:[%s6 + $0x18] sm:$0xff]
        %v1145 = vsel %vm414, %v1139, 0
        %1147 = vmatprep.subr.mxu0 0.0
        %1148 = vmatpush1.msra.mxu0 %v1140
        %1149 = vmatprep.subr.mxu0 0.0
        %1150 = vmatpush1.msra.mxu0 %v1141
        %1151 = vmatprep.subr.mxu0 0.0
        %1152 = vmatpush1.msra.mxu0 %v1142
        %1153 = vmatprep.subr.mxu0 0.0
        %1154 = vmatpush1.msra.mxu0 %v1143
        %1155 = vmatprep.subr.mxu0 0.0
        %1156 = vmatpush1.msra.mxu0 0.0
        %1157 = vmatprep.subr.mxu0 0.0
        %1158 = vmatpush1.msra.mxu0 0.0
        %1159 = vmatprep.subr.mxu0 0.0
        %1160 = vmatpush1.msra.mxu0 0.0
        %1161 = vmatprep.subr.mxu0 0.0
        %1162 = vmatpush1.msra.mxu0 0.0
        %1163 = vmatprep.subr.mxu0 0.0
        %1164 = vmatpush1.msra.mxu0 0.0
        %1165 = vmatprep.subr.mxu0 0.0
        %1166 = vmatpush1.msra.mxu0 0.0
        %1167 = vmatprep.subr.mxu0 0.0
        %1168 = vmatpush1.msra.mxu0 0.0
        %1169 = vmatprep.subr.mxu0 0.0
        %1170 = vmatpush1.msra.mxu0 0.0
        %1171 = vmatprep.subr.mxu0 0.0
        %1172 = vmatpush1.msra.mxu0 0.0
        %1173 = vmatprep.subr.mxu0 0.0
        %1174 = vmatpush1.msra.mxu0 0.0
        %1175 = vmatprep.subr.mxu0 0.0
        %1176 = vmatpush1.msra.mxu0 0.0
        %1177 = vmatprep.subr.mxu0 0.0
        %1178 = vmatpush1.msra.mxu0 0.0
        %1179 = vmatprep.subr.mxu0 0.0
        %1180 = vmatpush1.msra.mxu0 0.0
        %1181 = vmatprep.subr.mxu0 0.0
        %1182 = vmatpush1.msra.mxu0 0.0
        %1183 = vmatprep.subr.mxu0 0.0
        %1184 = vmatpush1.msra.mxu0 0.0
        %1185 = vmatprep.subr.mxu0 0.0
        %1186 = vmatpush1.msra.mxu0 0.0
        %1187 = vmatprep.subr.mxu0 0.0
        %1188 = vmatpush1.msra.mxu0 0.0
        %1189 = vmatprep.subr.mxu0 0.0
        %1190 = vmatpush1.msra.mxu0 0.0
        %1191 = vmatprep.subr.mxu0 0.0
        %1192 = vmatpush1.msra.mxu0 0.0
        %1193 = vmatprep.subr.mxu0 0.0
        %1194 = vmatpush1.msra.mxu0 0.0
        %1195 = vmatprep.subr.mxu0 0.0
        %1196 = vmatpush1.msra.mxu0 0.0
        %1197 = vmatprep.subr.mxu0 0.0
        %1198 = vmatpush1.msra.mxu0 0.0
        %1199 = vmatprep.subr.mxu0 0.0
        %1200 = vmatpush1.msra.mxu0 0.0
        %1201 = vmatprep.subr.mxu0 0.0
        %1202 = vmatpush1.msra.mxu0 0.0
        %1203 = vmatprep.subr.mxu0 0.0
        %1204 = vmatpush1.msra.mxu0 0.0
        %1205 = vmatprep.subr.mxu0 0.0
        %1206 = vmatpush1.msra.mxu0 0.0
        %1207 = vmatprep.subr.mxu0 0.0
        %1208 = vmatpush1.msra.mxu0 0.0
        %1209 = vmatprep.subr.mxu0 0.0
        %1210 = vmatpush1.msra.mxu0 0.0
        %1211 = vmatprep.mubr.f32.mxu0 0.0
        %1212 = vmatmul.mubr.f32.gmra.mrb[0].mxu0 %v1145
        %v1213 = vpop.f32.mrb[0].mxu0
        %v1214 = vadd.f32 0.0, %v1213
        %v1215 = vpop.f32.mrb[0].mxu0
        %1216 = vdwg.mxu0
        %v1217 = vlaneseq
        %v1218 = vand.u32 %v1217, 127
        %v1219 = vsel %vm538, %v1214, -inf
        %1220 = vmax.xlane.f32.xlu0 %v1219
        %v1221 = vpop.xlane.xlu0 %1220
        %vm1222 = vcmp.eq.f32.partialorder %v1214, %v1221
        %v1223 = vsel %vm1222, %v1218, 4
        %v1224 = vsel %vm538, %v1223, 2147483647
        %v1225 = vand.u32 %v1224, 65535
        %v1226 = vshra.s32 %v1224, 16
        %v1227 = vcvt.s32.f32 %v1225
        %v1228 = vcvt.s32.f32 %v1226
        %1229 = vmin.xlane.f32.xlu0 %v1228
        %v1230 = vpop.xlane.xlu0 %1229
        %vm1231 = vcmp.eq.f32.partialorder %v1228, %v1230
        %v1232 = vsel %vm1231, %v1227, inf
        %1233 = vmin.xlane.f32.xlu0 %v1232
        %v1234 = vpop.xlane.xlu0 %1233
        %v1235 = vcvt.f32.s32 %v1234
        %v1236 = vcvt.f32.s32 %v1230
        %v1237 = vshll.u32 %v1236, 16
        %v1238 = vadd.s32 %v1237, %v1235
        %vm1239 = vcmp.eq.s32.totalorder %v1218, %v1238
        %v1240 = vsel %vm1239, -1e+30, %v1214
        %v1241 = vsel %vm538, %v1240, -inf
        %1242 = vmax.xlane.f32.xlu0 %v1241
        %v1243 = vpop.xlane.xlu0 %1242
        %vm1244 = vcmp.eq.f32.partialorder %v1240, %v1243
        %v1245 = vsel %vm1244, %v1218, 4
        %v1246 = vsel %vm538, %v1245, 2147483647
        %v1247 = vand.u32 %v1246, 65535
        %v1248 = vshra.s32 %v1246, 16
        %v1249 = vcvt.s32.f32 %v1247
        %v1250 = vcvt.s32.f32 %v1248
        %1251 = vmin.xlane.f32.xlu0 %v1250
        %v1252 = vpop.xlane.xlu0 %1251
        %vm1253 = vcmp.eq.f32.partialorder %v1250, %v1252
        %v1254 = vsel %vm1253, %v1249, inf
        %1255 = vmin.xlane.f32.xlu0 %v1254
        %v1256 = vpop.xlane.xlu0 %1255
        %v1257 = vcvt.f32.s32 %v1256
        %v1258 = vcvt.f32.s32 %v1252
        %v1259 = vshll.u32 %v1258, 16
        %v1260 = vadd.s32 %v1259, %v1257
        %vm1261 = vcmp.eq.s32.totalorder %v1218, %v1260
        %v1262 = vsub.f32 %v1221, %v1221
        %v1263 = vmul.f32 %v1262, 1.442695
        %v1264 = vpow.pop %v1263
        %v1265 = vsub.f32 %v1243, %v1221
        %v1266 = vmul.f32 %v1265, 1.442695
        %v1267 = vpow.pop %v1266
        %v1268 = vadd.f32 %v1264, %v1267
        %v1269 = vrcp.pop %v1268
        %v1270 = vmul.f32 1.0, %v1269
        %v1271 = vmul.f32 %v1264, %v1270
        %v1272 = vsel %vm1239, 1, 0
        %v1273 = vcvt.s32.f32 %v1272
        %v1274 = vmul.f32 %v1271, %v1273
        %v1275 = vadd.f32 %v1274, 0.0
        %v1276 = vmul.f32 %v1267, %v1270
        %v1277 = vsel %vm1261, 1, 0
        %v1278 = vcvt.s32.f32 %v1277
        %v1279 = vmul.f32 %v1276, %v1278
        %v1280 = vadd.f32 %v1275, %v1279
        %v1281 = vld [vmem:[%s8] sm:$0xff]
        %v1282 = vld [vmem:[%s8 + $0x8] sm:$0xff]
        %v1283 = vld [vmem:[%s8 + $0x10] sm:$0xff]
        %v1284 = vld [vmem:[%s8 + $0x18] sm:$0xff]
        %v1285 = vld [vmem:[%s8 + $0x20] sm:$0xff]
        %v1286 = vld [vmem:[%s8 + $0x28] sm:$0xff]
        %v1287 = vld [vmem:[%s8 + $0x30] sm:$0xff]
        %v1288 = vld [vmem:[%s8 + $0x38] sm:$0xff]
        %1289 = vmatprep.subr.mxu0 %v1282
        %1290 = vmatpush1.msra.mxu0 %v1281
        %1291 = vmatprep.subr.mxu0 %v1284
        %1292 = vmatpush1.msra.mxu0 %v1283
        %1293 = vmatprep.subr.mxu0 %v1286
        %1294 = vmatpush1.msra.mxu0 %v1285
        %1295 = vmatprep.subr.mxu0 %v1288
        %1296 = vmatpush1.msra.mxu0 %v1287
        %1297 = vmatprep.subr.mxu0 0.0
        %1298 = vmatpush1.msra.mxu0 0.0
        %1299 = vmatprep.subr.mxu0 0.0
        %1300 = vmatpush1.msra.mxu0 0.0
        %1301 = vmatprep.subr.mxu0 0.0
        %1302 = vmatpush1.msra.mxu0 0.0
        %1303 = vmatprep.subr.mxu0 0.0
        %1304 = vmatpush1.msra.mxu0 0.0
        %1305 = vmatprep.subr.mxu0 0.0
        %1306 = vmatpush1.msra.mxu0 0.0
        %1307 = vmatprep.subr.mxu0 0.0
        %1308 = vmatpush1.msra.mxu0 0.0
        %1309 = vmatprep.subr.mxu0 0.0
        %1310 = vmatpush1.msra.mxu0 0.0
        %1311 = vmatprep.subr.mxu0 0.0
        %1312 = vmatpush1.msra.mxu0 0.0
        %1313 = vmatprep.subr.mxu0 0.0
        %1314 = vmatpush1.msra.mxu0 0.0
        %1315 = vmatprep.subr.mxu0 0.0
        %1316 = vmatpush1.msra.mxu0 0.0
        %1317 = vmatprep.subr.mxu0 0.0
        %1318 = vmatpush1.msra.mxu0 0.0
        %1319 = vmatprep.subr.mxu0 0.0
        %1320 = vmatpush1.msra.mxu0 0.0
        %1321 = vmatprep.subr.mxu0 0.0
        %1322 = vmatpush1.msra.mxu0 0.0
        %1323 = vmatprep.subr.mxu0 0.0
        %1324 = vmatpush1.msra.mxu0 0.0
        %1325 = vmatprep.subr.mxu0 0.0
        %1326 = vmatpush1.msra.mxu0 0.0
        %1327 = vmatprep.subr.mxu0 0.0
        %1328 = vmatpush1.msra.mxu0 0.0
        %1329 = vmatprep.subr.mxu0 0.0
        %1330 = vmatpush1.msra.mxu0 0.0
        %1331 = vmatprep.subr.mxu0 0.0
        %1332 = vmatpush1.msra.mxu0 0.0
        %1333 = vmatprep.subr.mxu0 0.0
        %1334 = vmatpush1.msra.mxu0 0.0
        %1335 = vmatprep.subr.mxu0 0.0
        %1336 = vmatpush1.msra.mxu0 0.0
        %1337 = vmatprep.subr.mxu0 0.0
        %1338 = vmatpush1.msra.mxu0 0.0
        %1339 = vmatprep.subr.mxu0 0.0
        %1340 = vmatpush1.msra.mxu0 0.0
        %1341 = vmatprep.subr.mxu0 0.0
        %1342 = vmatpush1.msra.mxu0 0.0
        %1343 = vmatprep.subr.mxu0 0.0
        %1344 = vmatpush1.msra.mxu0 0.0
        %1345 = vmatprep.subr.mxu0 0.0
        %1346 = vmatpush1.msra.mxu0 0.0
        %1347 = vmatprep.subr.mxu0 0.0
        %1348 = vmatpush1.msra.mxu0 0.0
        %1349 = vmatprep.subr.mxu0 0.0
        %1350 = vmatpush1.msra.mxu0 0.0
        %1351 = vmatprep.subr.mxu0 0.0
        %1352 = vmatpush1.msra.mxu0 0.0
        %1353 = vmatprep.mubr.f32.mxu0 0.0
        %1354 = vmatmul.mubr.f32.gmra.mrb[0].mxu0 %v1145
        %v1355 = vpop.f32.mrb[0].mxu0
        %v1356 = vadd.f32 0.0, %v1355
        %v1357 = vpop.f32.mrb[0].mxu0
        %v1358 = vadd.f32 0.0, %v1357
        %1359 = vdwg.mxu0
        %v1360 = vld [vmem:[%s9] sm:$0xff]
        %v1361 = vld [vmem:[%s9 + $0x8] sm:$0xff]
        %v1362 = vld [vmem:[%s9 + $0x10] sm:$0xff]
        %v1363 = vld [vmem:[%s9 + $0x18] sm:$0xff]
        %v1364 = vld [vmem:[%s9 + $0x20] sm:$0xff]
        %v1365 = vld [vmem:[%s9 + $0x28] sm:$0xff]
        %v1366 = vld [vmem:[%s9 + $0x30] sm:$0xff]
        %v1367 = vld [vmem:[%s9 + $0x38] sm:$0xff]
        %1368 = vmatprep.subr.mxu0 %v1361
        %1369 = vmatpush1.msra.mxu0 %v1360
        %1370 = vmatprep.subr.mxu0 %v1363
        %1371 = vmatpush1.msra.mxu0 %v1362
        %1372 = vmatprep.subr.mxu0 %v1365
        %1373 = vmatpush1.msra.mxu0 %v1364
        %1374 = vmatprep.subr.mxu0 %v1367
        %1375 = vmatpush1.msra.mxu0 %v1366
        %1376 = vmatprep.subr.mxu0 0.0
        %1377 = vmatpush1.msra.mxu0 0.0
        %1378 = vmatprep.subr.mxu0 0.0
        %1379 = vmatpush1.msra.mxu0 0.0
        %1380 = vmatprep.subr.mxu0 0.0
        %1381 = vmatpush1.msra.mxu0 0.0
        %1382 = vmatprep.subr.mxu0 0.0
        %1383 = vmatpush1.msra.mxu0 0.0
        %1384 = vmatprep.subr.mxu0 0.0
        %1385 = vmatpush1.msra.mxu0 0.0
        %1386 = vmatprep.subr.mxu0 0.0
        %1387 = vmatpush1.msra.mxu0 0.0
        %1388 = vmatprep.subr.mxu0 0.0
        %1389 = vmatpush1.msra.mxu0 0.0
        %1390 = vmatprep.subr.mxu0 0.0
        %1391 = vmatpush1.msra.mxu0 0.0
        %1392 = vmatprep.subr.mxu0 0.0
        %1393 = vmatpush1.msra.mxu0 0.0
        %1394 = vmatprep.subr.mxu0 0.0
        %1395 = vmatpush1.msra.mxu0 0.0
        %1396 = vmatprep.subr.mxu0 0.0
        %1397 = vmatpush1.msra.mxu0 0.0
        %1398 = vmatprep.subr.mxu0 0.0
        %1399 = vmatpush1.msra.mxu0 0.0
        %1400 = vmatprep.subr.mxu0 0.0
        %1401 = vmatpush1.msra.mxu0 0.0
        %1402 = vmatprep.subr.mxu0 0.0
        %1403 = vmatpush1.msra.mxu0 0.0
        %1404 = vmatprep.subr.mxu0 0.0
        %1405 = vmatpush1.msra.mxu0 0.0
        %1406 = vmatprep.subr.mxu0 0.0
        %1407 = vmatpush1.msra.mxu0 0.0
        %1408 = vmatprep.subr.mxu0 0.0
        %1409 = vmatpush1.msra.mxu0 0.0
        %1410 = vmatprep.subr.mxu0 0.0
        %1411 = vmatpush1.msra.mxu0 0.0
        %1412 = vmatprep.subr.mxu0 0.0
        %1413 = vmatpush1.msra.mxu0 0.0
        %1414 = vmatprep.subr.mxu0 0.0
        %1415 = vmatpush1.msra.mxu0 0.0
        %1416 = vmatprep.subr.mxu0 0.0
        %1417 = vmatpush1.msra.mxu0 0.0
        %1418 = vmatprep.subr.mxu0 0.0
        %1419 = vmatpush1.msra.mxu0 0.0
        %1420 = vmatprep.subr.mxu0 0.0
        %1421 = vmatpush1.msra.mxu0 0.0
        %1422 = vmatprep.subr.mxu0 0.0
        %1423 = vmatpush1.msra.mxu0 0.0
        %1424 = vmatprep.subr.mxu0 0.0
        %1425 = vmatpush1.msra.mxu0 0.0
        %1426 = vmatprep.subr.mxu0 0.0
        %1427 = vmatpush1.msra.mxu0 0.0
        %1428 = vmatprep.subr.mxu0 0.0
        %1429 = vmatpush1.msra.mxu0 0.0
        %1430 = vmatprep.subr.mxu0 0.0
        %1431 = vmatpush1.msra.mxu0 0.0
        %1432 = vmatprep.mubr.f32.mxu0 0.0
        %1433 = vmatmul.mubr.f32.gmra.mrb[0].mxu0 %v1145
        %v1434 = vpop.f32.mrb[0].mxu0
        %v1435 = vadd.f32 0.0, %v1434
        %v1436 = vpop.f32.mrb[0].mxu0
        %v1437 = vadd.f32 0.0, %v1436
        %1438 = vdwg.mxu0
        %v1439 = vsub.f32 0.0, %v1356
        %v1440 = vsub.f32 0.0, %v1358
        %v1441 = vmul.f32 %v1439, 1.442695
        %v1442 = vpow.pop %v1441
        %v1443 = vmul.f32 %v1440, 1.442695
        %v1444 = vpow.pop %v1443
        %v1445 = vadd.f32 %v1442, 1.0
        %v1446 = vadd.f32 %v1444, 1.0
        %v1447 = vrcp.pop %v1445
        %v1448 = vmul.f32 1.0, %v1447
        %v1449 = vrcp.pop %v1446
        %v1450 = vmul.f32 1.0, %v1449
        %v1451 = vmul.f32 %v1356, %v1448
        %v1452 = vmul.f32 %v1358, %v1450
        %v1453 = vmul.f32 %v1451, %v1435
        %v1454 = vmul.f32 %v1452, %v1437
        %v1455 = vld [vmem:[%s7] sm:$0xff]
        %v1457 = vcombine.high %v1455, %v1455
        %v1459 = vsel %vm538, %v1280, 0
        %vm1461 = vcmask 1043456
        %v1462 = vsel %vm1461, %v1455, 0
        %v1464 = vsel %vm1461, %v1457, 0
        %1466 = vmatprep.subr.mxu0 %v1464
        %1467 = vmatpush1.msra.mxu0 %v1462
        %1468 = vmatprep.subr.mxu0 0.0
        %1469 = vmatpush1.msra.mxu0 0.0
        %1470 = vmatprep.subr.mxu0 0.0
        %1471 = vmatpush1.msra.mxu0 0.0
        %1472 = vmatprep.subr.mxu0 0.0
        %1473 = vmatpush1.msra.mxu0 0.0
        %1474 = vmatprep.subr.mxu0 0.0
        %1475 = vmatpush1.msra.mxu0 0.0
        %1476 = vmatprep.subr.mxu0 0.0
        %1477 = vmatpush1.msra.mxu0 0.0
        %1478 = vmatprep.subr.mxu0 0.0
        %1479 = vmatpush1.msra.mxu0 0.0
        %1480 = vmatprep.subr.mxu0 0.0
        %1481 = vmatpush1.msra.mxu0 0.0
        %1482 = vmatprep.subr.mxu0 0.0
        %1483 = vmatpush1.msra.mxu0 0.0
        %1484 = vmatprep.subr.mxu0 0.0
        %1485 = vmatpush1.msra.mxu0 0.0
        %1486 = vmatprep.subr.mxu0 0.0
        %1487 = vmatpush1.msra.mxu0 0.0
        %1488 = vmatprep.subr.mxu0 0.0
        %1489 = vmatpush1.msra.mxu0 0.0
        %1490 = vmatprep.subr.mxu0 0.0
        %1491 = vmatpush1.msra.mxu0 0.0
        %1492 = vmatprep.subr.mxu0 0.0
        %1493 = vmatpush1.msra.mxu0 0.0
        %1494 = vmatprep.subr.mxu0 0.0
        %1495 = vmatpush1.msra.mxu0 0.0
        %1496 = vmatprep.subr.mxu0 0.0
        %1497 = vmatpush1.msra.mxu0 0.0
        %1498 = vmatprep.subr.mxu0 0.0
        %1499 = vmatpush1.msra.mxu0 0.0
        %1500 = vmatprep.subr.mxu0 0.0
        %1501 = vmatpush1.msra.mxu0 0.0
        %1502 = vmatprep.subr.mxu0 0.0
        %1503 = vmatpush1.msra.mxu0 0.0
        %1504 = vmatprep.subr.mxu0 0.0
        %1505 = vmatpush1.msra.mxu0 0.0
        %1506 = vmatprep.subr.mxu0 0.0
        %1507 = vmatpush1.msra.mxu0 0.0
        %1508 = vmatprep.subr.mxu0 0.0
        %1509 = vmatpush1.msra.mxu0 0.0
        %1510 = vmatprep.subr.mxu0 0.0
        %1511 = vmatpush1.msra.mxu0 0.0
        %1512 = vmatprep.subr.mxu0 0.0
        %1513 = vmatpush1.msra.mxu0 0.0
        %1514 = vmatprep.subr.mxu0 0.0
        %1515 = vmatpush1.msra.mxu0 0.0
        %1516 = vmatprep.subr.mxu0 0.0
        %1517 = vmatpush1.msra.mxu0 0.0
        %1518 = vmatprep.subr.mxu0 0.0
        %1519 = vmatpush1.msra.mxu0 0.0
        %1520 = vmatprep.subr.mxu0 0.0
        %1521 = vmatpush1.msra.mxu0 0.0
        %1522 = vmatprep.subr.mxu0 0.0
        %1523 = vmatpush1.msra.mxu0 0.0
        %1524 = vmatprep.subr.mxu0 0.0
        %1525 = vmatpush1.msra.mxu0 0.0
        %1526 = vmatprep.subr.mxu0 0.0
        %1527 = vmatpush1.msra.mxu0 0.0
        %1528 = vmatprep.subr.mxu0 0.0
        %1529 = vmatpush1.msra.mxu0 0.0
        %1530 = vmatprep.mubr.f32.mxu0 0.0
        %1531 = vmatmul.mubr.f32.gmra.mrb[0].mxu0 %v1459
        %v1532 = vpop.f32.mrb[0].mxu0
        %v1533 = vadd.f32 0.0, %v1532
        %v1534 = vpop.f32.mrb[0].mxu0
        %v1535 = vadd.f32 0.0, %v1534
        %1536 = vdwg.mxu0
        %v1537 = vmul.f32 %v1453, %v1533
        %v1538 = vmul.f32 %v1454, %v1535
        %v1539 = vld [vmem:[%s10] sm:$0xff]
        %v1540 = vld [vmem:[%s10 + $0x8] sm:$0xff]
        %v1541 = vld [vmem:[%s10 + $0x10] sm:$0xff]
        %v1542 = vld [vmem:[%s10 + $0x18] sm:$0xff]
        %v1543 = vld [vmem:[%s10 + $0x20] sm:$0xff]
        %v1544 = vld [vmem:[%s10 + $0x28] sm:$0xff]
        %v1545 = vld [vmem:[%s10 + $0x30] sm:$0xff]
        %v1546 = vld [vmem:[%s10 + $0x38] sm:$0xff]
        %v1547 = vld [vmem:[%s10 + $0x40] sm:$0xff]
        %v1548 = vld [vmem:[%s10 + $0x48] sm:$0xff]
        %v1549 = vld [vmem:[%s10 + $0x50] sm:$0xff]
        %v1550 = vld [vmem:[%s10 + $0x58] sm:$0xff]
        %v1551 = vld [vmem:[%s10 + $0x60] sm:$0xff]
        %v1552 = vld [vmem:[%s10 + $0x68] sm:$0xff]
        %v1553 = vld [vmem:[%s10 + $0x70] sm:$0xff]
        %v1554 = vld [vmem:[%s10 + $0x78] sm:$0xff]
        %v1555 = vld [vmem:[%s10 + $0x80] sm:$0xff]
        %v1556 = vld [vmem:[%s10 + $0x88] sm:$0xff]
        %v1557 = vld [vmem:[%s10 + $0x90] sm:$0xff]
        %v1558 = vld [vmem:[%s10 + $0x98] sm:$0xff]
        %v1559 = vld [vmem:[%s10 + $0xa0] sm:$0xff]
        %v1560 = vld [vmem:[%s10 + $0xa8] sm:$0xff]
        %v1561 = vld [vmem:[%s10 + $0xb0] sm:$0xff]
        %v1562 = vld [vmem:[%s10 + $0xb8] sm:$0xff]
        %v1563 = vld [vmem:[%s10 + $0xc0] sm:$0xff]
        %v1564 = vld [vmem:[%s10 + $0xc8] sm:$0xff]
        %v1565 = vld [vmem:[%s10 + $0xd0] sm:$0xff]
        %v1566 = vld [vmem:[%s10 + $0xd8] sm:$0xff]
        %v1567 = vld [vmem:[%s10 + $0xe0] sm:$0xff]
        %v1568 = vld [vmem:[%s10 + $0xe8] sm:$0xff]
        %v1569 = vld [vmem:[%s10 + $0xf0] sm:$0xff]
        %v1570 = vld [vmem:[%s10 + $0xf8] sm:$0xff]
        %1571 = vmatprep.subr.mxu0 0.0
        %1572 = vmatpush1.msra.mxu0 %v1539
        %1573 = vmatprep.subr.mxu0 0.0
        %1574 = vmatpush1.msra.mxu0 %v1540
        %1575 = vmatprep.subr.mxu0 0.0
        %1576 = vmatpush1.msra.mxu0 %v1541
        %1577 = vmatprep.subr.mxu0 0.0
        %1578 = vmatpush1.msra.mxu0 %v1542
        %1579 = vmatprep.subr.mxu0 0.0
        %1580 = vmatpush1.msra.mxu0 %v1543
        %1581 = vmatprep.subr.mxu0 0.0
        %1582 = vmatpush1.msra.mxu0 %v1544
        %1583 = vmatprep.subr.mxu0 0.0
        %1584 = vmatpush1.msra.mxu0 %v1545
        %1585 = vmatprep.subr.mxu0 0.0
        %1586 = vmatpush1.msra.mxu0 %v1546
        %1587 = vmatprep.subr.mxu0 0.0
        %1588 = vmatpush1.msra.mxu0 %v1547
        %1589 = vmatprep.subr.mxu0 0.0
        %1590 = vmatpush1.msra.mxu0 %v1548
        %1591 = vmatprep.subr.mxu0 0.0
        %1592 = vmatpush1.msra.mxu0 %v1549
        %1593 = vmatprep.subr.mxu0 0.0
        %1594 = vmatpush1.msra.mxu0 %v1550
        %1595 = vmatprep.subr.mxu0 0.0
        %1596 = vmatpush1.msra.mxu0 %v1551
        %1597 = vmatprep.subr.mxu0 0.0
        %1598 = vmatpush1.msra.mxu0 %v1552
        %1599 = vmatprep.subr.mxu0 0.0
        %1600 = vmatpush1.msra.mxu0 %v1553
        %1601 = vmatprep.subr.mxu0 0.0
        %1602 = vmatpush1.msra.mxu0 %v1554
        %1603 = vmatprep.subr.mxu0 0.0
        %1604 = vmatpush1.msra.mxu0 %v1555
        %1605 = vmatprep.subr.mxu0 0.0
        %1606 = vmatpush1.msra.mxu0 %v1556
        %1607 = vmatprep.subr.mxu0 0.0
        %1608 = vmatpush1.msra.mxu0 %v1557
        %1609 = vmatprep.subr.mxu0 0.0
        %1610 = vmatpush1.msra.mxu0 %v1558
        %1611 = vmatprep.subr.mxu0 0.0
        %1612 = vmatpush1.msra.mxu0 %v1559
        %1613 = vmatprep.subr.mxu0 0.0
        %1614 = vmatpush1.msra.mxu0 %v1560
        %1615 = vmatprep.subr.mxu0 0.0
        %1616 = vmatpush1.msra.mxu0 %v1561
        %1617 = vmatprep.subr.mxu0 0.0
        %1618 = vmatpush1.msra.mxu0 %v1562
        %1619 = vmatprep.subr.mxu0 0.0
        %1620 = vmatpush1.msra.mxu0 %v1563
        %1621 = vmatprep.subr.mxu0 0.0
        %1622 = vmatpush1.msra.mxu0 %v1564
        %1623 = vmatprep.subr.mxu0 0.0
        %1624 = vmatpush1.msra.mxu0 %v1565
        %1625 = vmatprep.subr.mxu0 0.0
        %1626 = vmatpush1.msra.mxu0 %v1566
        %1627 = vmatprep.subr.mxu0 0.0
        %1628 = vmatpush1.msra.mxu0 %v1567
        %1629 = vmatprep.subr.mxu0 0.0
        %1630 = vmatpush1.msra.mxu0 %v1568
        %1631 = vmatprep.subr.mxu0 0.0
        %1632 = vmatpush1.msra.mxu0 %v1569
        %1633 = vmatprep.subr.mxu0 0.0
        %1634 = vmatpush1.msra.mxu0 %v1570
        %1635 = vmatprep.mubr.f32.mxu0 %v1538
        %1636 = vmatmul.mubr.f32.gmra.mrb[0].mxu0 %v1537
        %v1637 = vpop.f32.mrb[0].mxu0
        %v1638 = vadd.f32 %v1139, %v1637
        %v1639 = vpop.f32.mrb[0].mxu0
        %1640 = vdwg.mxu0
        %v1641 = vmul.f32 %v1638, %v1638
        %v1642 = vsel %vm414, %v1641, 0.0
        %1643 = vadd.xlane.f32.xlu0 %v1642
        %v1644 = vpop.xlane.xlu0 %1643
        %v1645 = vmul.f32 %v1644, %v1127
        %v1646 = vadd.f32 %v1645, 1e-08
        %v1647 = vrsqrt.pop %v1646
        %v1648 = vmul.f32 %v1638, %v1647
        %v1649 = vld [vmem:[%s11] sm:$0x1]
        %v1651 = vlaneseq
        %v1652 = vshrl.u32 %v1651, 7
        %v1653 = vsub.s32 0, %v1652
        %v1654 = vrot.slane %v1649, %v1653
        %v1656 = vmul.f32 %v1648, %v1654
        %1657 = vst.msk [vmem:[%s404] sm:$0xff] %vm414, %v1656
        %s1658 = sand.u32 %s291, 1
        %s1659 = scalar_lea.sflag [#allocation3], %s1658
        %s1660 = sand.u32 %s291, 1
        %s1661 = smul.addr %s1660, 8
        %s1662 = scalar_lea.vmem [#allocation2], %s1661
        // Predicated region
        $region69: #{encoder_layer.1} parent=67 // pred_check
          %p1663 = pneg %p301
        $region70: #{encoder_layer.1} parent=67 // pred_check_branch
          %1665 = sbr.rel (%p1663) target = $region72
        $region71: #{encoder_layer.1} parent=67 // pred_region
          %s1667 = ssub.s32 128, 128
          %1668 = vsyncadd %s1659, %s1667
          %s1669 = smul.addr %s26, 128
          %s1670 = scalar_lea.hbm %s12, %s1669
          %s1672 = sshll.u32 %s1662, 4
          %s1673 = int_to_ptr.vmem [resolvable:$true] %s1672
          %1675 = dma.vmem_to_hbm [thread:$0]  %s1673, 128, %s1670, %s1659
        $region72: #{encoder_layer.1} parent=67 // pred_fallthru
          _
      $region68: #{encoder_layer.1} parent=5 // pred_fallthru
        _
      %p1676 = scmp.le.s32.totalorder 2, %s21
      // Predicated region
      $region73: #{encoder_layer.1} parent=5 // pred_check
        %p1677 = pneg %p1676
      $region74: #{encoder_layer.1} parent=5 // pred_check_branch
        %1679 = sbr.rel (%p1677) target = $region76
      $region75: #{encoder_layer.1} parent=5 // pred_region
        %s1680 = ssub.s32 %s21, 2
        // Predicated region
        $region77: #{encoder_layer.1} parent=75 // pred_check
          %p1681 = pneg %p307
        $region78: #{encoder_layer.1} parent=75 // pred_check_branch
          %1683 = sbr.rel (%p1681) target = $region80
        $region79: #{encoder_layer.1} parent=75 // pred_region
          %s1684 = sand.u32 %s292, 1
          %s1685 = scalar_lea.sflag [#allocation3], %s1684
          %s1686 = sand.u32 %s292, 1
          %s1687 = smul.addr %s1686, 8
          %s1688 = scalar_lea.vmem [#allocation2], %s1687
          %1689 = dma.done %s1685, 128
        $region80: #{encoder_layer.1} parent=75 // pred_fallthru
          _
      $region76: #{encoder_layer.1} parent=5 // pred_fallthru
        _
    $region6: #{encoder_layer.1} parent=1 // loop_footer
      %s25 = sadd.s32 1, %s21
    $region7: #{encoder_layer.1} parent=1 // loop_footer_branch
      %20 = sbr.rel target = $region3
    $region8: #{encoder_layer.1} parent=1 // loop_exit
      _
    %1690 = vsyncpa [#allocation3], 1
    %s1691 = scalar_lea.sflag [#allocation3], 1
    %1692 = vsyncpa %s1691, 1

</llo_original>
